<compile_context>
chip_gen: v7x
topology: tpu7x:2x2x1
jax: 0.10.0
libtpu: 0.0.40
codegen_flags: <defaults>
</compile_context>

<pallas_src>
import functools

import jax
import jax.numpy as jnp
from jax import lax
from jax.experimental import pallas as pl
from jax.experimental.pallas import tpu as pltpu


def _round_up(v, m):
    return (v + m - 1) // m * m


# ------------------------------ fused kernel --------------------------------

def _make_fused_kernel(C_out, KH, KW, ph, pw, Wp, HALO, LOUT):
    """Conv(3x3, pad) + bias + ReLU + masked avg-pool + linear head, one image."""

    def kernel(x_ref, w_ref, cb_ref, pool_ref, fcw_ref, fcb_ref, o_ref):
        # x_ref    : [1, C_in, LBUF]      bf16  halo-padded, flattened image
        # w_ref    : [KH*KW, C_out, C_in] bf16  conv taps
        # cb_ref   : [C_out, 1]           f32   conv bias (column)
        # pool_ref : [1, LOUT]            f32   1/(H*W) at valid lanes, else 0
        # fcw_ref  : [num_cls, C_out]     f32   linear weight
        # fcb_ref  : [1, num_cls]         f32   linear bias (row)
        # o_ref    : [1, 1, num_cls]      f32   logits for this sample
        acc = jnp.zeros((C_out, LOUT), jnp.float32)
        for dh in range(KH):
            for dw in range(KW):
                s = (dh - ph) * Wp + (dw - pw)          # static lane shift
                tap = dh * KW + dw
                win = x_ref[0, :, pl.ds(HALO + s, LOUT)]   # [C_in, LOUT] bf16
                acc += jnp.dot(w_ref[tap], win,
                               preferred_element_type=jnp.float32)

        # f32 epilogue: bias + ReLU (garbage at non-center lanes is masked by
        # the pooling weights below, never written out).
        acc = jnp.maximum(acc + cb_ref[...], 0.0)       # [C_out, LOUT]

        # masked global average pool:  [1,LOUT] @ [C_out,LOUT]^T -> [1,C_out]
        pooled = lax.dot_general(pool_ref[...], acc,
                                 (((1,), (1,)), ((), ())),
                                 preferred_element_type=jnp.float32)

        # classifier head:  [1,C_out] @ [num_cls,C_out]^T -> [1,num_cls]
        logits = lax.dot_general(pooled, fcw_ref[...],
                                 (((1,), (1,)), ((), ())),
                                 preferred_element_type=jnp.float32)
        o_ref[0] = logits + fcb_ref[...]

    return kernel


# -------------------------------- wrapper ------------------------------------

@jax.jit
def inno_model_forward(x, params):
    """Forward pass of the (adapted) model inside InnoModel.

    x: [N, C_in, H, W] float32 (NCHW).  Returns logits [N, num_classes].
    """
    conv_w, conv_b = params["conv_w"], params["conv_b"]
    fc_w, fc_b = params["fc_w"], params["fc_b"]

    N, C_in, H, W = x.shape
    C_out, _, KH, KW = conv_w.shape
    num_cls = fc_w.shape[0]

    ph, pw = KH // 2, KW // 2                   # "same" padding
    Hp, Wp = H + 2 * ph, W + 2 * pw
    L0 = Hp * Wp                                # flattened padded image length
    HALO = ph * Wp + pw                         # max |lane shift| for any tap
    LBUF = _round_up(L0 + 2 * HALO, 128)        # lane-padded buffer length

    # ---- one-time glue (no 9x expansion, no big transpose) ------------------
    xp = jnp.pad(x, ((0, 0), (0, 0), (ph, ph), (pw, pw)))    # [N,C_in,Hp,Wp]
    xf = xp.reshape(N, C_in, L0)
    xf = jnp.pad(xf, ((0, 0), (0, 0), (HALO, LBUF - L0 - HALO)))
    xf = xf.astype(jnp.bfloat16)                             # [N,C_in,LBUF]

    # conv taps reordered so tap = dh*KW + dw indexes a [C_out, C_in] matrix
    wk = conv_w.transpose(2, 3, 0, 1).reshape(KH * KW, C_out, C_in)
    wk = wk.astype(jnp.bfloat16)
    cb = conv_b.reshape(C_out, 1).astype(jnp.float32)

    # pooling weights: 1/(H*W) at lanes that correspond to real output pixels
    hp_i = jnp.arange(Hp)
    wp_i = jnp.arange(Wp)
    valid = (((hp_i >= ph) & (hp_i < H + ph))[:, None]
             & ((wp_i >= pw) & (wp_i < W + pw))[None, :])
    pool_w = (valid.astype(jnp.float32) / float(H * W)).reshape(1, L0)

    fcw = fc_w.astype(jnp.float32)                           # [num_cls, C_out]
    fcb = fc_b.reshape(1, num_cls).astype(jnp.float32)

    kernel = _make_fused_kernel(C_out, KH, KW, ph, pw, Wp, HALO, L0)

    out = pl.pallas_call(
        kernel,
        out_shape=jax.ShapeDtypeStruct((N, 1, num_cls), jnp.float32),
        grid=(N,),
        in_specs=[
            pl.BlockSpec((1, C_in, LBUF), lambda n: (n, 0, 0)),
            pl.BlockSpec((KH * KW, C_out, C_in), lambda n: (0, 0, 0)),
            pl.BlockSpec((C_out, 1), lambda n: (0, 0)),
            pl.BlockSpec((1, L0), lambda n: (0, 0)),
            pl.BlockSpec((num_cls, C_out), lambda n: (0, 0)),
            pl.BlockSpec((1, num_cls), lambda n: (0, 0)),
        ],
        out_specs=pl.BlockSpec((1, 1, num_cls), lambda n: (n, 0, 0)),
        compiler_params=pltpu.CompilerParams(
            dimension_semantics=("parallel",)),
    )(xf, wk, cb, pool_w, fcw, fcb)

    return out.reshape(N, num_cls)


# ------------------------------ params / reference ---------------------------

def make_params(key, c_in=4, c_out=8, k=3, num_cls=10):
    """Deterministic synthetic parameter init (matches nn.Conv2d/Linear shapes)."""
    k1, k2, k3, k4 = jax.random.split(key, 4)
    return {
        "conv_w": jax.random.normal(k1, (c_out, c_in, k, k), jnp.float32) * 0.1,
        "conv_b": jax.random.normal(k2, (c_out,), jnp.float32) * 0.1,
        "fc_w":   jax.random.normal(k3, (num_cls, c_out), jnp.float32) * 0.1,
        "fc_b":   jax.random.normal(k4, (num_cls,), jnp.float32) * 0.1,
    }


def _ref_forward(x, params):
    y = jax.lax.conv_general_dilated(
        x, params["conv_w"], window_strides=(1, 1), padding="SAME",
        dimension_numbers=("NCHW", "OIHW", "NCHW"),
    ) + params["conv_b"][None, :, None, None]
    y = jnp.maximum(y, 0.0)
    pooled = y.mean(axis=(2, 3))                    # [N, C_out]
    return pooled @ params["fc_w"].T + params["fc_b"]


if __name__ == "__main__":
    key = jax.random.PRNGKey(0)
    kx, kp = jax.random.split(key)
    x = jax.random.normal(kx, (2, 4, 16, 16), jnp.float32)   # NCHW
    params = make_params(kp)

    out = jax.block_until_ready(inno_model_forward(x, params))
    ref = _ref_forward(x, params)
    assert out.shape == (2, 10), out.shape
    # bf16 image/conv-weight inputs (f32 accumulation) -> loosened tolerance.
    assert jnp.allclose(out, ref, atol=1e-2, rtol=1e-2), (
        float(jnp.max(jnp.abs(out - ref)))
    )
    print("KERNEL_OK")
</pallas_src>

<mosaic_0001>
module attributes {stable_mosaic.version = 11 : i64} {
  func.func @kernel(%arg0: i32, %arg1: memref<1x4x384xbf16, #tpu.memory_space<vmem>>, %arg2: memref<9x8x4xbf16, #tpu.memory_space<vmem>>, %arg3: memref<8x1xf32, #tpu.memory_space<vmem>>, %arg4: memref<1x324xf32, #tpu.memory_space<vmem>>, %arg5: memref<10x8xf32, #tpu.memory_space<vmem>>, %arg6: memref<1x10xf32, #tpu.memory_space<vmem>>, %arg7: memref<1x1x10xf32, #tpu.memory_space<vmem>>) attributes {dimension_semantics = [#tpu.dimension_semantics<parallel>], iteration_bounds = array<i64: 2>, scalar_prefetch = 0 : i64, scratch_operands = 0 : i64, tpu.core_type = #tpu.core_type<tc>, window_params = [{transform_indices = @transform_0, window_bounds = array<i64: 1, 4, 384>}, {pipeline_mode = #tpu.pipeline_mode<synchronous>, transform_indices = @transform_1, window_bounds = array<i64: 9, 8, 4>}, {pipeline_mode = #tpu.pipeline_mode<synchronous>, transform_indices = @transform_2, window_bounds = array<i64: 8, 1>}, {pipeline_mode = #tpu.pipeline_mode<synchronous>, transform_indices = @transform_3, window_bounds = array<i64: 1, 324>}, {pipeline_mode = #tpu.pipeline_mode<synchronous>, transform_indices = @transform_4, window_bounds = array<i64: 10, 8>}, {pipeline_mode = #tpu.pipeline_mode<synchronous>, transform_indices = @transform_5, window_bounds = array<i64: 1, 10>}, {transform_indices = @transform_6, window_bounds = array<i64: 1, 1, 10>}]} {
    %cst = arith.constant 0.000000e+00 : f32
    %0 = vector.broadcast %cst : f32 to vector<8x324xf32>
    %c0 = arith.constant 0 : index
    %c0_0 = arith.constant 0 : index
    %c0_1 = arith.constant 0 : index
    %1 = vector.load %arg1[%c0, %c0_0, %c0_1] : memref<1x4x384xbf16, #tpu.memory_space<vmem>>, vector<1x4x324xbf16>
    %2 = vector.shape_cast %1 : vector<1x4x324xbf16> to vector<4x324xbf16>
    %c0_2 = arith.constant 0 : index
    %c0_3 = arith.constant 0 : index
    %c0_4 = arith.constant 0 : index
    %3 = vector.load %arg2[%c0_2, %c0_3, %c0_4] : memref<9x8x4xbf16, #tpu.memory_space<vmem>>, vector<1x8x4xbf16>
    %4 = vector.shape_cast %3 : vector<1x8x4xbf16> to vector<8x4xbf16>
    %cst_5 = arith.constant dense<0.000000e+00> : vector<8x324xf32>
    %5 = tpu.matmul %4, %2, %cst_5 {dimension_numbers = #tpu.dot_dimension_numbers<[1], [0], [0], [1], [0, 0, 1, 1], [], []>} : vector<8x4xbf16>, vector<4x324xbf16>, vector<8x324xf32> -> vector<8x324xf32>
    %6 = arith.addf %0, %5 : vector<8x324xf32>
    %c0_6 = arith.constant 0 : index
    %c0_7 = arith.constant 0 : index
    %c1 = arith.constant 1 : index
    %7 = vector.load %arg1[%c0_6, %c0_7, %c1] : memref<1x4x384xbf16, #tpu.memory_space<vmem>>, vector<1x4x324xbf16>
    %8 = vector.shape_cast %7 : vector<1x4x324xbf16> to vector<4x324xbf16>
    %c1_8 = arith.constant 1 : index
    %c0_9 = arith.constant 0 : index
    %c0_10 = arith.constant 0 : index
    %9 = vector.load %arg2[%c1_8, %c0_9, %c0_10] : memref<9x8x4xbf16, #tpu.memory_space<vmem>>, vector<1x8x4xbf16>
    %10 = vector.shape_cast %9 : vector<1x8x4xbf16> to vector<8x4xbf16>
    %cst_11 = arith.constant dense<0.000000e+00> : vector<8x324xf32>
    %11 = tpu.matmul %10, %8, %cst_11 {dimension_numbers = #tpu.dot_dimension_numbers<[1], [0], [0], [1], [0, 0, 1, 1], [], []>} : vector<8x4xbf16>, vector<4x324xbf16>, vector<8x324xf32> -> vector<8x324xf32>
    %12 = arith.addf %6, %11 : vector<8x324xf32>
    %c0_12 = arith.constant 0 : index
    %c0_13 = arith.constant 0 : index
    %c2 = arith.constant 2 : index
    %13 = vector.load %arg1[%c0_12, %c0_13, %c2] : memref<1x4x384xbf16, #tpu.memory_space<vmem>>, vector<1x4x324xbf16>
    %14 = vector.shape_cast %13 : vector<1x4x324xbf16> to vector<4x324xbf16>
    %c2_14 = arith.constant 2 : index
    %c0_15 = arith.constant 0 : index
    %c0_16 = arith.constant 0 : index
    %15 = vector.load %arg2[%c2_14, %c0_15, %c0_16] : memref<9x8x4xbf16, #tpu.memory_space<vmem>>, vector<1x8x4xbf16>
    %16 = vector.shape_cast %15 : vector<1x8x4xbf16> to vector<8x4xbf16>
    %cst_17 = arith.constant dense<0.000000e+00> : vector<8x324xf32>
    %17 = tpu.matmul %16, %14, %cst_17 {dimension_numbers = #tpu.dot_dimension_numbers<[1], [0], [0], [1], [0, 0, 1, 1], [], []>} : vector<8x4xbf16>, vector<4x324xbf16>, vector<8x324xf32> -> vector<8x324xf32>
    %18 = arith.addf %12, %17 : vector<8x324xf32>
    %c0_18 = arith.constant 0 : index
    %c0_19 = arith.constant 0 : index
    %c18 = arith.constant 18 : index
    %19 = vector.load %arg1[%c0_18, %c0_19, %c18] : memref<1x4x384xbf16, #tpu.memory_space<vmem>>, vector<1x4x324xbf16>
    %20 = vector.shape_cast %19 : vector<1x4x324xbf16> to vector<4x324xbf16>
    %c3 = arith.constant 3 : index
    %c0_20 = arith.constant 0 : index
    %c0_21 = arith.constant 0 : index
    %21 = vector.load %arg2[%c3, %c0_20, %c0_21] : memref<9x8x4xbf16, #tpu.memory_space<vmem>>, vector<1x8x4xbf16>
    %22 = vector.shape_cast %21 : vector<1x8x4xbf16> to vector<8x4xbf16>
    %cst_22 = arith.constant dense<0.000000e+00> : vector<8x324xf32>
    %23 = tpu.matmul %22, %20, %cst_22 {dimension_numbers = #tpu.dot_dimension_numbers<[1], [0], [0], [1], [0, 0, 1, 1], [], []>} : vector<8x4xbf16>, vector<4x324xbf16>, vector<8x324xf32> -> vector<8x324xf32>
    %24 = arith.addf %18, %23 : vector<8x324xf32>
    %c0_23 = arith.constant 0 : index
    %c0_24 = arith.constant 0 : index
    %c19 = arith.constant 19 : index
    %25 = vector.load %arg1[%c0_23, %c0_24, %c19] : memref<1x4x384xbf16, #tpu.memory_space<vmem>>, vector<1x4x324xbf16>
    %26 = vector.shape_cast %25 : vector<1x4x324xbf16> to vector<4x324xbf16>
    %c4 = arith.constant 4 : index
    %c0_25 = arith.constant 0 : index
    %c0_26 = arith.constant 0 : index
    %27 = vector.load %arg2[%c4, %c0_25, %c0_26] : memref<9x8x4xbf16, #tpu.memory_space<vmem>>, vector<1x8x4xbf16>
    %28 = vector.shape_cast %27 : vector<1x8x4xbf16> to vector<8x4xbf16>
    %cst_27 = arith.constant dense<0.000000e+00> : vector<8x324xf32>
    %29 = tpu.matmul %28, %26, %cst_27 {dimension_numbers = #tpu.dot_dimension_numbers<[1], [0], [0], [1], [0, 0, 1, 1], [], []>} : vector<8x4xbf16>, vector<4x324xbf16>, vector<8x324xf32> -> vector<8x324xf32>
    %30 = arith.addf %24, %29 : vector<8x324xf32>
    %c0_28 = arith.constant 0 : index
    %c0_29 = arith.constant 0 : index
    %c20 = arith.constant 20 : index
    %31 = vector.load %arg1[%c0_28, %c0_29, %c20] : memref<1x4x384xbf16, #tpu.memory_space<vmem>>, vector<1x4x324xbf16>
    %32 = vector.shape_cast %31 : vector<1x4x324xbf16> to vector<4x324xbf16>
    %c5 = arith.constant 5 : index
    %c0_30 = arith.constant 0 : index
    %c0_31 = arith.constant 0 : index
    %33 = vector.load %arg2[%c5, %c0_30, %c0_31] : memref<9x8x4xbf16, #tpu.memory_space<vmem>>, vector<1x8x4xbf16>
    %34 = vector.shape_cast %33 : vector<1x8x4xbf16> to vector<8x4xbf16>
    %cst_32 = arith.constant dense<0.000000e+00> : vector<8x324xf32>
    %35 = tpu.matmul %34, %32, %cst_32 {dimension_numbers = #tpu.dot_dimension_numbers<[1], [0], [0], [1], [0, 0, 1, 1], [], []>} : vector<8x4xbf16>, vector<4x324xbf16>, vector<8x324xf32> -> vector<8x324xf32>
    %36 = arith.addf %30, %35 : vector<8x324xf32>
    %c0_33 = arith.constant 0 : index
    %c0_34 = arith.constant 0 : index
    %c36 = arith.constant 36 : index
    %37 = vector.load %arg1[%c0_33, %c0_34, %c36] : memref<1x4x384xbf16, #tpu.memory_space<vmem>>, vector<1x4x324xbf16>
    %38 = vector.shape_cast %37 : vector<1x4x324xbf16> to vector<4x324xbf16>
    %c6 = arith.constant 6 : index
    %c0_35 = arith.constant 0 : index
    %c0_36 = arith.constant 0 : index
    %39 = vector.load %arg2[%c6, %c0_35, %c0_36] : memref<9x8x4xbf16, #tpu.memory_space<vmem>>, vector<1x8x4xbf16>
    %40 = vector.shape_cast %39 : vector<1x8x4xbf16> to vector<8x4xbf16>
    %cst_37 = arith.constant dense<0.000000e+00> : vector<8x324xf32>
    %41 = tpu.matmul %40, %38, %cst_37 {dimension_numbers = #tpu.dot_dimension_numbers<[1], [0], [0], [1], [0, 0, 1, 1], [], []>} : vector<8x4xbf16>, vector<4x324xbf16>, vector<8x324xf32> -> vector<8x324xf32>
    %42 = arith.addf %36, %41 : vector<8x324xf32>
    %c0_38 = arith.constant 0 : index
    %c0_39 = arith.constant 0 : index
    %c37 = arith.constant 37 : index
    %43 = vector.load %arg1[%c0_38, %c0_39, %c37] : memref<1x4x384xbf16, #tpu.memory_space<vmem>>, vector<1x4x324xbf16>
    %44 = vector.shape_cast %43 : vector<1x4x324xbf16> to vector<4x324xbf16>
    %c7 = arith.constant 7 : index
    %c0_40 = arith.constant 0 : index
    %c0_41 = arith.constant 0 : index
    %45 = vector.load %arg2[%c7, %c0_40, %c0_41] : memref<9x8x4xbf16, #tpu.memory_space<vmem>>, vector<1x8x4xbf16>
    %46 = vector.shape_cast %45 : vector<1x8x4xbf16> to vector<8x4xbf16>
    %cst_42 = arith.constant dense<0.000000e+00> : vector<8x324xf32>
    %47 = tpu.matmul %46, %44, %cst_42 {dimension_numbers = #tpu.dot_dimension_numbers<[1], [0], [0], [1], [0, 0, 1, 1], [], []>} : vector<8x4xbf16>, vector<4x324xbf16>, vector<8x324xf32> -> vector<8x324xf32>
    %48 = arith.addf %42, %47 : vector<8x324xf32>
    %c0_43 = arith.constant 0 : index
    %c0_44 = arith.constant 0 : index
    %c38 = arith.constant 38 : index
    %49 = vector.load %arg1[%c0_43, %c0_44, %c38] : memref<1x4x384xbf16, #tpu.memory_space<vmem>>, vector<1x4x324xbf16>
    %50 = vector.shape_cast %49 : vector<1x4x324xbf16> to vector<4x324xbf16>
    %c8 = arith.constant 8 : index
    %c0_45 = arith.constant 0 : index
    %c0_46 = arith.constant 0 : index
    %51 = vector.load %arg2[%c8, %c0_45, %c0_46] : memref<9x8x4xbf16, #tpu.memory_space<vmem>>, vector<1x8x4xbf16>
    %52 = vector.shape_cast %51 : vector<1x8x4xbf16> to vector<8x4xbf16>
    %cst_47 = arith.constant dense<0.000000e+00> : vector<8x324xf32>
    %53 = tpu.matmul %52, %50, %cst_47 {dimension_numbers = #tpu.dot_dimension_numbers<[1], [0], [0], [1], [0, 0, 1, 1], [], []>} : vector<8x4xbf16>, vector<4x324xbf16>, vector<8x324xf32> -> vector<8x324xf32>
    %54 = arith.addf %48, %53 : vector<8x324xf32>
    %c0_48 = arith.constant 0 : index
    %c0_49 = arith.constant 0 : index
    %55 = vector.load %arg3[%c0_48, %c0_49] : memref<8x1xf32, #tpu.memory_space<vmem>>, vector<8x1xf32>
    %56 = vector.broadcast %55 : vector<8x1xf32> to vector<8x324xf32>
    %57 = arith.addf %54, %56 : vector<8x324xf32>
    %cst_50 = arith.constant 0.000000e+00 : f32
    %58 = vector.broadcast %cst_50 : f32 to vector<8x324xf32>
    %59 = arith.maximumf %57, %58 : vector<8x324xf32>
    %c0_51 = arith.constant 0 : index
    %c0_52 = arith.constant 0 : index
    %60 = vector.load %arg4[%c0_51, %c0_52] : memref<1x324xf32, #tpu.memory_space<vmem>>, vector<1x324xf32>
    %cst_53 = arith.constant dense<0.000000e+00> : vector<1x8xf32>
    %61 = tpu.matmul %60, %59, %cst_53 {dimension_numbers = #tpu.dot_dimension_numbers<[1], [1], [0], [0], [0, 0, 1, 0], [], []>} : vector<1x324xf32>, vector<8x324xf32>, vector<1x8xf32> -> vector<1x8xf32>
    %c0_54 = arith.constant 0 : index
    %c0_55 = arith.constant 0 : index
    %62 = vector.load %arg5[%c0_54, %c0_55] : memref<10x8xf32, #tpu.memory_space<vmem>>, vector<10x8xf32>
    %cst_56 = arith.constant dense<0.000000e+00> : vector<1x10xf32>
    %63 = tpu.matmul %61, %62, %cst_56 {dimension_numbers = #tpu.dot_dimension_numbers<[1], [1], [0], [0], [0, 0, 1, 0], [], []>} : vector<1x8xf32>, vector<10x8xf32>, vector<1x10xf32> -> vector<1x10xf32>
    %c0_57 = arith.constant 0 : index
    %c0_58 = arith.constant 0 : index
    %64 = vector.load %arg6[%c0_57, %c0_58] : memref<1x10xf32, #tpu.memory_space<vmem>>, vector<1x10xf32>
    %65 = arith.addf %63, %64 : vector<1x10xf32>
    %c0_59 = arith.constant 0 : index
    %c0_60 = arith.constant 0 : index
    %c0_61 = arith.constant 0 : index
    %66 = vector.load %arg7[%c0_59, %c0_60, %c0_61] : memref<1x1x10xf32, #tpu.memory_space<vmem>>, vector<1x1x10xf32>
    %67 = vector.shape_cast %66 : vector<1x1x10xf32> to vector<1x10xf32>
    %68 = vector.shape_cast %65 : vector<1x10xf32> to vector<1x1x10xf32>
    tpu.vector_store %arg7[%c0_59, %c0_60, %c0_61], %68 {strides = array<i32>} : memref<1x1x10xf32, #tpu.memory_space<vmem>>, vector<1x1x10xf32>,
    return
  }
  func.func @transform_0(%arg0: i32) -> (i32, i32, i32) {
    %c0_i32 = arith.constant 0 : i32
    %c0_i32_0 = arith.constant 0 : i32
    %c0_i32_1 = arith.constant 0 : i32
    return %arg0, %c0_i32, %c0_i32_0 : i32, i32, i32
  }
  func.func @transform_1(%arg0: i32) -> (i32, i32, i32) {
    %c0_i32 = arith.constant 0 : i32
    %c0_i32_0 = arith.constant 0 : i32
    %c0_i32_1 = arith.constant 0 : i32
    %c0_i32_2 = arith.constant 0 : i32
    return %c0_i32, %c0_i32_0, %c0_i32_1 : i32, i32, i32
  }
  func.func @transform_2(%arg0: i32) -> (i32, i32) {
    %c0_i32 = arith.constant 0 : i32
    %c0_i32_0 = arith.constant 0 : i32
    %c0_i32_1 = arith.constant 0 : i32
    return %c0_i32, %c0_i32_0 : i32, i32
  }
  func.func @transform_3(%arg0: i32) -> (i32, i32) {
    %c0_i32 = arith.constant 0 : i32
    %c0_i32_0 = arith.constant 0 : i32
    %c0_i32_1 = arith.constant 0 : i32
    return %c0_i32, %c0_i32_0 : i32, i32
  }
  func.func @transform_4(%arg0: i32) -> (i32, i32) {
    %c0_i32 = arith.constant 0 : i32
    %c0_i32_0 = arith.constant 0 : i32
    %c0_i32_1 = arith.constant 0 : i32
    return %c0_i32, %c0_i32_0 : i32, i32
  }
  func.func @transform_5(%arg0: i32) -> (i32, i32) {
    %c0_i32 = arith.constant 0 : i32
    %c0_i32_0 = arith.constant 0 : i32
    %c0_i32_1 = arith.constant 0 : i32
    return %c0_i32, %c0_i32_0 : i32, i32
  }
  func.func @transform_6(%arg0: i32) -> (i32, i32, i32) {
    %c0_i32 = arith.constant 0 : i32
    %c0_i32_0 = arith.constant 0 : i32
    %c0_i32_1 = arith.constant 0 : i32
    return %arg0, %c0_i32, %c0_i32_0 : i32, i32, i32
  }
}

</mosaic_0001>

<llo_original>
// kernel: inno_model_forward.1
$region0: #{inno_model_forward.1}
  #allocation0 [shape = 'u32[]', space=smem, size = 0x4, offset = 0x4, fixed_abs, tag = 'smem constant byte address 0x4 - core index']
  #allocation1 [shape = 'u32[144,128]{1,0:T(1,128)}', space=vmem, size = 0x12000, scoped, tag = 'internal scratch']
  %s0 = inlined_call_operand.vmem [shape: bf16[2,4,384], index: 0, kind: input, shape index: {}]
  %s1 = inlined_call_operand.vmem [shape: bf16[9,8,4], index: 1, kind: input, shape index: {}]
  %s2 = inlined_call_operand.vmem [shape: f32[8,1], index: 2, kind: input, shape index: {}]
  %s3 = inlined_call_operand.vmem [shape: f32[1,324], index: 3, kind: input, shape index: {}]
  %s4 = inlined_call_operand.vmem [shape: f32[10,8], index: 4, kind: input, shape index: {}]
  %s5 = inlined_call_operand.vmem [shape: f32[1,10], index: 5, kind: input, shape index: {}]
  %s6 = inlined_call_operand.hbm [shape: f32[2,1,10], index: 6, kind: output, shape index: {}]
  %s7 = sld [smem:[#allocation0]]
  $region57: #{inno_model_forward.1} parent=0
    _
  %s9 = ssub.s32 1, %s7
  %s10 = scalar_select 0, %s9, %s7
  $region1: #{inno_model_forward.1} parent=0
    #allocation2 [shape = 'u8[1024]{0}', space=vmem, size = 0x400, scoped, tag = 'output window, operand 0']
    #allocation3 [shape = 's32[2]{0}', space=sflag, size = 0x8, scoped, tag = 'scoped memory for inno_model_forward.1']
    %11 = vsyncpa [#allocation3], 0
    %s12 = scalar_lea.sflag [#allocation3], 1
    %13 = vsyncpa %s12, 0
    loop: start=0, step=1, limit=4
    $region2: #{inno_model_forward.1} parent=1 // loop_pre_header
      _
    $region3: #{inno_model_forward.1} parent=1 // loop_header
      %s15 = sphi 0, %s19
      %p16 = scmp.ge.s32.totalorder %s15, 4
      %s25 = sphi 0, %s27
      %s28 = sphi 0, %s25
      %s29 = sphi 0, %s28
      %s45 = sphi 0, %s29
      %s49 = sphi 0, %s49
      %s51 = sphi 0, %s49
      %s52 = sphi 0, %s51
      %s66 = sphi 0, %s52
      %s70 = sphi 0, %s70
      %s72 = sphi 0, %s70
      %s73 = sphi 0, %s72
      %s87 = sphi 0, %s73
      %s91 = sphi 0, %s91
      %s93 = sphi 0, %s91
      %s94 = sphi 0, %s93
      %s108 = sphi 0, %s94
      %s112 = sphi 0, %s112
      %s114 = sphi 0, %s112
      %s115 = sphi 0, %s114
      %s129 = sphi 0, %s115
      %s133 = sphi 0, %s133
      %s135 = sphi 0, %s133
      %s136 = sphi 0, %s135
      %s150 = sphi 0, %s136
      %s156 = sphi 0, %s158
      %s159 = sphi 0, %s156
      %s160 = sphi 0, %s159
      %s176 = sphi 0, %s160
    $region4: #{inno_model_forward.1} parent=1 // loop_header_branch
      %18 = sbr.rel (%p16) target = $region8
    $region5: #{inno_model_forward.1} parent=1 // loop_body
      %s20 = ssub.s32 %s15, 1
      %s21 = ssub.s32 %s15, 2
      %s22 = sadd.s32 %s15, 1
      %s23 = ssub.s32 %s15, %s22
      %p24 = scmp.eq.s32.totalorder %s23, 0
      %s26 = sadd.s32 %s25, 1
      %s27 = scalar_select %p24, %s25, %s26
      %p30 = pneg %p24
      %p31 = scmp.eq.s32.totalorder %s15, 1
      %p32 = por %p30, %p31
      %p33 = scmp.ne.s32.totalorder %s25, %s28
      %p34 = scmp.eq.s32.totalorder %s15, 0
      %p35 = por %p33, %p34
      %p36 = scmp.ne.s32.totalorder %s25, %s28
      %p37 = scmp.eq.s32.totalorder %s20, 1
      %p38 = por %p36, %p37
      %p39 = scmp.ne.s32.totalorder %s28, %s29
      %p40 = scmp.eq.s32.totalorder %s20, 0
      %p41 = por %p39, %p40
      %p42 = scmp.ne.s32.totalorder %s28, %s29
      %p43 = scmp.eq.s32.totalorder %s21, 1
      %p44 = por %p42, %p43
      %p46 = scmp.ne.s32.totalorder %s29, %s45
      %p47 = scmp.eq.s32.totalorder %s21, 0
      %p48 = por %p46, %p47
      %s50 = sadd.s32 %s49, 1
      %p53 = scmp.eq.s32.totalorder %s15, 1
      %p54 = scmp.ne.s32.totalorder %s49, %s51
      %p55 = scmp.eq.s32.totalorder %s15, 0
      %p56 = por %p54, %p55
      %p57 = scmp.ne.s32.totalorder %s49, %s51
      %p58 = scmp.eq.s32.totalorder %s20, 1
      %p59 = por %p57, %p58
      %p60 = scmp.ne.s32.totalorder %s51, %s52
      %p61 = scmp.eq.s32.totalorder %s20, 0
      %p62 = por %p60, %p61
      %p63 = scmp.ne.s32.totalorder %s51, %s52
      %p64 = scmp.eq.s32.totalorder %s21, 1
      %p65 = por %p63, %p64
      %p67 = scmp.ne.s32.totalorder %s52, %s66
      %p68 = scmp.eq.s32.totalorder %s21, 0
      %p69 = por %p67, %p68
      %s71 = sadd.s32 %s70, 1
      %p74 = scmp.eq.s32.totalorder %s15, 1
      %p75 = scmp.ne.s32.totalorder %s70, %s72
      %p76 = scmp.eq.s32.totalorder %s15, 0
      %p77 = por %p75, %p76
      %p78 = scmp.ne.s32.totalorder %s70, %s72
      %p79 = scmp.eq.s32.totalorder %s20, 1
      %p80 = por %p78, %p79
      %p81 = scmp.ne.s32.totalorder %s72, %s73
      %p82 = scmp.eq.s32.totalorder %s20, 0
      %p83 = por %p81, %p82
      %p84 = scmp.ne.s32.totalorder %s72, %s73
      %p85 = scmp.eq.s32.totalorder %s21, 1
      %p86 = por %p84, %p85
      %p88 = scmp.ne.s32.totalorder %s73, %s87
      %p89 = scmp.eq.s32.totalorder %s21, 0
      %p90 = por %p88, %p89
      %s92 = sadd.s32 %s91, 1
      %p95 = scmp.eq.s32.totalorder %s15, 1
      %p96 = scmp.ne.s32.totalorder %s91, %s93
      %p97 = scmp.eq.s32.totalorder %s15, 0
      %p98 = por %p96, %p97
      %p99 = scmp.ne.s32.totalorder %s91, %s93
      %p100 = scmp.eq.s32.totalorder %s20, 1
      %p101 = por %p99, %p100
      %p102 = scmp.ne.s32.totalorder %s93, %s94
      %p103 = scmp.eq.s32.totalorder %s20, 0
      %p104 = por %p102, %p103
      %p105 = scmp.ne.s32.totalorder %s93, %s94
      %p106 = scmp.eq.s32.totalorder %s21, 1
      %p107 = por %p105, %p106
      %p109 = scmp.ne.s32.totalorder %s94, %s108
      %p110 = scmp.eq.s32.totalorder %s21, 0
      %p111 = por %p109, %p110
      %s113 = sadd.s32 %s112, 1
      %p116 = scmp.eq.s32.totalorder %s15, 1
      %p117 = scmp.ne.s32.totalorder %s112, %s114
      %p118 = scmp.eq.s32.totalorder %s15, 0
      %p119 = por %p117, %p118
      %p120 = scmp.ne.s32.totalorder %s112, %s114
      %p121 = scmp.eq.s32.totalorder %s20, 1
      %p122 = por %p120, %p121
      %p123 = scmp.ne.s32.totalorder %s114, %s115
      %p124 = scmp.eq.s32.totalorder %s20, 0
      %p125 = por %p123, %p124
      %p126 = scmp.ne.s32.totalorder %s114, %s115
      %p127 = scmp.eq.s32.totalorder %s21, 1
      %p128 = por %p126, %p127
      %p130 = scmp.ne.s32.totalorder %s115, %s129
      %p131 = scmp.eq.s32.totalorder %s21, 0
      %p132 = por %p130, %p131
      %s134 = sadd.s32 %s133, 1
      %p137 = scmp.eq.s32.totalorder %s15, 1
      %p138 = scmp.ne.s32.totalorder %s133, %s135
      %p139 = scmp.eq.s32.totalorder %s15, 0
      %p140 = por %p138, %p139
      %p141 = scmp.ne.s32.totalorder %s133, %s135
      %p142 = scmp.eq.s32.totalorder %s20, 1
      %p143 = por %p141, %p142
      %p144 = scmp.ne.s32.totalorder %s135, %s136
      %p145 = scmp.eq.s32.totalorder %s20, 0
      %p146 = por %p144, %p145
      %p147 = scmp.ne.s32.totalorder %s135, %s136
      %p148 = scmp.eq.s32.totalorder %s21, 1
      %p149 = por %p147, %p148
      %p151 = scmp.ne.s32.totalorder %s136, %s150
      %p152 = scmp.eq.s32.totalorder %s21, 0
      %p153 = por %p151, %p152
      %s154 = ssub.s32 %s15, %s22
      %p155 = scmp.eq.s32.totalorder %s154, 0
      %s157 = sadd.s32 %s156, 1
      %s158 = scalar_select %p155, %s156, %s157
      %p161 = pneg %p155
      %p162 = scmp.eq.s32.totalorder %s15, 1
      %p163 = por %p161, %p162
      %p164 = scmp.ne.s32.totalorder %s156, %s159
      %p165 = scmp.eq.s32.totalorder %s15, 0
      %p166 = por %p164, %p165
      %p167 = scmp.ne.s32.totalorder %s156, %s159
      %p168 = scmp.eq.s32.totalorder %s20, 1
      %p169 = por %p167, %p168
      %p170 = scmp.ne.s32.totalorder %s159, %s160
      %p171 = scmp.eq.s32.totalorder %s20, 0
      %p172 = por %p170, %p171
      %p173 = scmp.ne.s32.totalorder %s159, %s160
      %p174 = scmp.eq.s32.totalorder %s21, 1
      %p175 = por %p173, %p174
      %p177 = scmp.ne.s32.totalorder %s160, %s176
      %p178 = scmp.eq.s32.totalorder %s21, 0
      %p179 = por %p177, %p178
      %p180 = scmp.le.s32.totalorder 1, %s15
      %p181 = scmp.lt.s32.totalorder %s15, 3
      %p182 = pnand %p180, %p181
      %p183 = pneg %p182
      // Predicated region
      $region9: #{inno_model_forward.1} parent=5 // pred_check
        _
      $region10: #{inno_model_forward.1} parent=5 // pred_check_branch
        %185 = sbr.rel (%p182) target = $region12
      $region11: #{inno_model_forward.1} parent=5 // pred_region
        %s186 = ssub.s32 %s15, 1
        // Predicated region
        $region13: #{inno_model_forward.1} parent=11 // pred_check
          %p187 = pneg %p62
        $region14: #{inno_model_forward.1} parent=11 // pred_check_branch
          %189 = sbr.rel (%p187) target = $region16
        $region15: #{inno_model_forward.1} parent=11 // pred_region
          _
        $region16: #{inno_model_forward.1} parent=11 // pred_fallthru
          _
        // Predicated region
        $region17: #{inno_model_forward.1} parent=11 // pred_check
          %p190 = pneg %p83
        $region18: #{inno_model_forward.1} parent=11 // pred_check_branch
          %192 = sbr.rel (%p190) target = $region20
        $region19: #{inno_model_forward.1} parent=11 // pred_region
          _
        $region20: #{inno_model_forward.1} parent=11 // pred_fallthru
          _
        // Predicated region
        $region21: #{inno_model_forward.1} parent=11 // pred_check
          %p193 = pneg %p104
        $region22: #{inno_model_forward.1} parent=11 // pred_check_branch
          %195 = sbr.rel (%p193) target = $region24
        $region23: #{inno_model_forward.1} parent=11 // pred_region
          _
        $region24: #{inno_model_forward.1} parent=11 // pred_fallthru
          _
        // Predicated region
        $region25: #{inno_model_forward.1} parent=11 // pred_check
          %p196 = pneg %p125
        $region26: #{inno_model_forward.1} parent=11 // pred_check_branch
          %198 = sbr.rel (%p196) target = $region28
        $region27: #{inno_model_forward.1} parent=11 // pred_region
          _
        $region28: #{inno_model_forward.1} parent=11 // pred_fallthru
          _
        // Predicated region
        $region29: #{inno_model_forward.1} parent=11 // pred_check
          %p199 = pneg %p146
        $region30: #{inno_model_forward.1} parent=11 // pred_check_branch
          %201 = sbr.rel (%p199) target = $region32
        $region31: #{inno_model_forward.1} parent=11 // pred_region
          _
        $region32: #{inno_model_forward.1} parent=11 // pred_fallthru
          _
      $region12: #{inno_model_forward.1} parent=5 // pred_fallthru
        _
      %p202 = scmp.lt.s32.totalorder %s15, 2
      // Predicated region
      $region33: #{inno_model_forward.1} parent=5 // pred_check
        %p203 = pneg %p202
      $region34: #{inno_model_forward.1} parent=5 // pred_check_branch
        %205 = sbr.rel (%p203) target = $region36
      $region35: #{inno_model_forward.1} parent=5 // pred_region
        // Predicated region
        $region37: #{inno_model_forward.1} parent=35 // pred_check
          %p206 = pneg %p35
        $region38: #{inno_model_forward.1} parent=35 // pred_check_branch
          %208 = sbr.rel (%p206) target = $region40
        $region39: #{inno_model_forward.1} parent=35 // pred_region
          %p209 = scmp.lt.s32.totalorder %s15, 1
          %s210 = scalar_select %p209, %s15, 1
          %s211 = smul.addr %s210, 3
          %s212 = smul.addr %s211, 2
          %s213 = scalar_lea.vmem %s0, %s212
        $region40: #{inno_model_forward.1} parent=35 // pred_fallthru
          _
      $region36: #{inno_model_forward.1} parent=5 // pred_fallthru
        _
      %p214 = scmp.le.s32.totalorder 1, %s15
      %p215 = scmp.lt.s32.totalorder %s15, 3
      %p216 = pnand %p214, %p215
      %p217 = pneg %p216
      // Predicated region
      $region41: #{inno_model_forward.1} parent=5 // pred_check
        _
      $region42: #{inno_model_forward.1} parent=5 // pred_check_branch
        %219 = sbr.rel (%p216) target = $region44
      $region43: #{inno_model_forward.1} parent=5 // pred_region
        %s220 = ssub.s32 %s15, 1
        %p221 = scmp.lt.s32.totalorder %s20, 1
        %s222 = scalar_select %p221, %s20, 1
        %s223 = smul.addr %s222, 3
        %s224 = smul.addr %s223, 2
        %s225 = scalar_lea.vmem %s0, %s224
        %p226 = pneg %p41
        %p227 = pneg %p38
        %p228 = pneg %p62
        %p229 = pneg %p59
        %p230 = pneg %p83
        %p231 = pneg %p80
        %p232 = pneg %p104
        %p233 = pneg %p101
        %p234 = pneg %p125
        %p235 = pneg %p122
        %p236 = pneg %p146
        %p237 = pneg %p143
        %p238 = pneg %p172
        %p239 = pneg %p169
        %s240 = sand.u32 %s159, 1
        %s241 = scalar_lea.sflag [#allocation3], %s240
        %s242 = sand.u32 %s159, 1
        %s243 = scalar_lea.vmem [#allocation2], %s242
        %p244 = scmp.lt.s32.totalorder %s20, 1
        %s245 = scalar_select %p244, %s20, 1
        %s246 = smul.addr %s245, 3
        %s247 = smul.addr %s246, 2
        %s248 = scalar_lea.vmem %s0, %s247
        %v250 = vld [vmem:[%s248] sm:$0x3f]
        %v251 = vld [vmem:[%s1] sm:$0xf]
        %s252 = scalar_lea.vmem %s1, 4
        %v253 = vld [vmem:[%s252] sm:$0xf]
        %v255 = vcombine.high %v250, %v250
        %v257 = vunpack.c.l.s4 1983009808
        %v258 = vunpack.c.0.s8 %v257
        %v259 = vlaneseq
        %v260 = vshrl.u32 %v259, 7
        %v261 = vsub.s32 %v258, %v260
        %v262 = vrot.slane %v250, %v261
        %v264 = vunpack.c.l.s4 1983009808
        %v265 = vunpack.c.0.s8 %v264
        %v266 = vlaneseq
        %v267 = vshrl.u32 %v266, 7
        %v268 = vsub.s32 %v265, %v267
        %v269 = vrot.slane %v255, %v268
        %v270 = vcombine.high %v262, %v262
        %271 = vrot.lane.b32.xlu0 %v262, 127
        %v272 = vpop.permute.xlu0 %271
        %273 = vrot.lane.b32.xlu0 %v270, 127
        %v274 = vpop.permute.xlu0 %273
        %275 = vrot.lane.b32.xlu0 %v269, 127
        %v276 = vpop.permute.xlu0 %275
        %vm277 = vcmask 1039360
        %v278 = vsel %vm277, %v272, %v274
        %v279 = vsel %vm277, %v274, %v276
        %vm280 = vcmask 31744
        %v282 = vsel %vm280, %v253, 0
        %vm284 = vcmask 1041408
        %v286 = vsel %vm284, %v278, 0
        %v289 = vsel %vm284, %v279, 0
        %v292 = vsel %vm284, %v276, 0
        %294 = vmatprep.subr.bf16.mxu0 %v289
        %295 = vmatpush1.bf16.msra.mxu0 %v286
        %296 = vmatprep.subr.bf16.mxu0 0
        %297 = vmatpush1.bf16.msra.mxu0 0
        %298 = vmatprep.subr.bf16.mxu0 0
        %299 = vmatpush1.bf16.msra.mxu0 0
        %300 = vmatprep.subr.bf16.mxu0 0
        %301 = vmatpush1.bf16.msra.mxu0 0
        %302 = vmatprep.subr.bf16.mxu0 0
        %303 = vmatpush1.bf16.msra.mxu0 0
        %304 = vmatprep.subr.bf16.mxu0 0
        %305 = vmatpush1.bf16.msra.mxu0 0
        %306 = vmatprep.subr.bf16.mxu0 0
        %307 = vmatpush1.bf16.msra.mxu0 0
        %308 = vmatprep.subr.bf16.mxu0 0
        %309 = vmatpush1.bf16.msra.mxu0 0
        %310 = vmatprep.subr.bf16.mxu0 0
        %311 = vmatpush1.bf16.msra.mxu0 0
        %312 = vmatprep.subr.bf16.mxu0 0
        %313 = vmatpush1.bf16.msra.mxu0 0
        %314 = vmatprep.subr.bf16.mxu0 0
        %315 = vmatpush1.bf16.msra.mxu0 0
        %316 = vmatprep.subr.bf16.mxu0 0
        %317 = vmatpush1.bf16.msra.mxu0 0
        %318 = vmatprep.subr.bf16.mxu0 0
        %319 = vmatpush1.bf16.msra.mxu0 0
        %320 = vmatprep.subr.bf16.mxu0 0
        %321 = vmatpush1.bf16.msra.mxu0 0
        %322 = vmatprep.subr.bf16.mxu0 0
        %323 = vmatpush1.bf16.msra.mxu0 0
        %324 = vmatprep.subr.bf16.mxu0 0
        %325 = vmatpush1.bf16.msra.mxu0 0
        %326 = vmatprep.mubr.bf16.mxu0 0
        %327 = vmatmul.mubr.bf16.gmra.mrb[0].mxu0 %v282
        %v328 = vpop.f32.mrb[0].mxu0
        %v329 = vadd.f32 0.0, %v328
        %v330 = vpop.f32.mrb[0].mxu0
        %v331 = vadd.f32 0.0, %v330
        %v332 = vpop.f32.mrb[0].mxu0
        %v333 = vpop.f32.mrb[0].mxu0
        %334 = vdwg.mxu0
        %335 = vmatprep.subr.bf16.mxu0 0
        %336 = vmatpush1.bf16.msra.mxu0 %v292
        %337 = vmatprep.subr.bf16.mxu0 0
        %338 = vmatpush1.bf16.msra.mxu0 0
        %339 = vmatprep.subr.bf16.mxu0 0
        %340 = vmatpush1.bf16.msra.mxu0 0
        %341 = vmatprep.subr.bf16.mxu0 0
        %342 = vmatpush1.bf16.msra.mxu0 0
        %343 = vmatprep.subr.bf16.mxu0 0
        %344 = vmatpush1.bf16.msra.mxu0 0
        %345 = vmatprep.subr.bf16.mxu0 0
        %346 = vmatpush1.bf16.msra.mxu0 0
        %347 = vmatprep.subr.bf16.mxu0 0
        %348 = vmatpush1.bf16.msra.mxu0 0
        %349 = vmatprep.subr.bf16.mxu0 0
        %350 = vmatpush1.bf16.msra.mxu0 0
        %351 = vmatprep.subr.bf16.mxu0 0
        %352 = vmatpush1.bf16.msra.mxu0 0
        %353 = vmatprep.subr.bf16.mxu0 0
        %354 = vmatpush1.bf16.msra.mxu0 0
        %355 = vmatprep.subr.bf16.mxu0 0
        %356 = vmatpush1.bf16.msra.mxu0 0
        %357 = vmatprep.subr.bf16.mxu0 0
        %358 = vmatpush1.bf16.msra.mxu0 0
        %359 = vmatprep.subr.bf16.mxu0 0
        %360 = vmatpush1.bf16.msra.mxu0 0
        %361 = vmatprep.subr.bf16.mxu0 0
        %362 = vmatpush1.bf16.msra.mxu0 0
        %363 = vmatprep.subr.bf16.mxu0 0
        %364 = vmatpush1.bf16.msra.mxu0 0
        %365 = vmatprep.subr.bf16.mxu0 0
        %366 = vmatpush1.bf16.msra.mxu0 0
        %367 = vmatprep.mubr.bf16.mxu0 0
        %368 = vmatmul.mubr.bf16.gmra.mrb[0].mxu0 %v282
        %v369 = vpop.f32.mrb[0].mxu0
        %v370 = vadd.f32 0.0, %v369
        %v371 = vpop.f32.mrb[0].mxu0
        %v372 = vpop.f32.mrb[0].mxu0
        %v373 = vpop.f32.mrb[0].mxu0
        %374 = vdwg.mxu0
        %v376 = vsel %vm280, %v251, 0
        %v379 = vsel %vm284, %v262, 0
        %v382 = vsel %vm284, %v270, 0
        %v385 = vsel %vm284, %v269, 0
        %387 = vmatprep.subr.bf16.mxu0 %v382
        %388 = vmatpush1.bf16.msra.mxu0 %v379
        %389 = vmatprep.subr.bf16.mxu0 0
        %390 = vmatpush1.bf16.msra.mxu0 0
        %391 = vmatprep.subr.bf16.mxu0 0
        %392 = vmatpush1.bf16.msra.mxu0 0
        %393 = vmatprep.subr.bf16.mxu0 0
        %394 = vmatpush1.bf16.msra.mxu0 0
        %395 = vmatprep.subr.bf16.mxu0 0
        %396 = vmatpush1.bf16.msra.mxu0 0
        %397 = vmatprep.subr.bf16.mxu0 0
        %398 = vmatpush1.bf16.msra.mxu0 0
        %399 = vmatprep.subr.bf16.mxu0 0
        %400 = vmatpush1.bf16.msra.mxu0 0
        %401 = vmatprep.subr.bf16.mxu0 0
        %402 = vmatpush1.bf16.msra.mxu0 0
        %403 = vmatprep.subr.bf16.mxu0 0
        %404 = vmatpush1.bf16.msra.mxu0 0
        %405 = vmatprep.subr.bf16.mxu0 0
        %406 = vmatpush1.bf16.msra.mxu0 0
        %407 = vmatprep.subr.bf16.mxu0 0
        %408 = vmatpush1.bf16.msra.mxu0 0
        %409 = vmatprep.subr.bf16.mxu0 0
        %410 = vmatpush1.bf16.msra.mxu0 0
        %411 = vmatprep.subr.bf16.mxu0 0
        %412 = vmatpush1.bf16.msra.mxu0 0
        %413 = vmatprep.subr.bf16.mxu0 0
        %414 = vmatpush1.bf16.msra.mxu0 0
        %415 = vmatprep.subr.bf16.mxu0 0
        %416 = vmatpush1.bf16.msra.mxu0 0
        %417 = vmatprep.subr.bf16.mxu0 0
        %418 = vmatpush1.bf16.msra.mxu0 0
        %419 = vmatprep.mubr.bf16.mxu0 0
        %420 = vmatmul.mubr.bf16.gmra.mrb[0].mxu0 %v376
        %v421 = vpop.f32.mrb[0].mxu0
        %v422 = vadd.f32 %v329, %v421
        %v423 = vpop.f32.mrb[0].mxu0
        %v424 = vadd.f32 %v331, %v423
        %v425 = vpop.f32.mrb[0].mxu0
        %v426 = vpop.f32.mrb[0].mxu0
        %427 = vdwg.mxu0
        %428 = vmatprep.subr.bf16.mxu0 0
        %429 = vmatpush1.bf16.msra.mxu0 %v385
        %430 = vmatprep.subr.bf16.mxu0 0
        %431 = vmatpush1.bf16.msra.mxu0 0
        %432 = vmatprep.subr.bf16.mxu0 0
        %433 = vmatpush1.bf16.msra.mxu0 0
        %434 = vmatprep.subr.bf16.mxu0 0
        %435 = vmatpush1.bf16.msra.mxu0 0
        %436 = vmatprep.subr.bf16.mxu0 0
        %437 = vmatpush1.bf16.msra.mxu0 0
        %438 = vmatprep.subr.bf16.mxu0 0
        %439 = vmatpush1.bf16.msra.mxu0 0
        %440 = vmatprep.subr.bf16.mxu0 0
        %441 = vmatpush1.bf16.msra.mxu0 0
        %442 = vmatprep.subr.bf16.mxu0 0
        %443 = vmatpush1.bf16.msra.mxu0 0
        %444 = vmatprep.subr.bf16.mxu0 0
        %445 = vmatpush1.bf16.msra.mxu0 0
        %446 = vmatprep.subr.bf16.mxu0 0
        %447 = vmatpush1.bf16.msra.mxu0 0
        %448 = vmatprep.subr.bf16.mxu0 0
        %449 = vmatpush1.bf16.msra.mxu0 0
        %450 = vmatprep.subr.bf16.mxu0 0
        %451 = vmatpush1.bf16.msra.mxu0 0
        %452 = vmatprep.subr.bf16.mxu0 0
        %453 = vmatpush1.bf16.msra.mxu0 0
        %454 = vmatprep.subr.bf16.mxu0 0
        %455 = vmatpush1.bf16.msra.mxu0 0
        %456 = vmatprep.subr.bf16.mxu0 0
        %457 = vmatpush1.bf16.msra.mxu0 0
        %458 = vmatprep.subr.bf16.mxu0 0
        %459 = vmatpush1.bf16.msra.mxu0 0
        %460 = vmatprep.mubr.bf16.mxu0 0
        %461 = vmatmul.mubr.bf16.gmra.mrb[0].mxu0 %v376
        %v462 = vpop.f32.mrb[0].mxu0
        %v463 = vadd.f32 %v370, %v462
        %v464 = vpop.f32.mrb[0].mxu0
        %v465 = vpop.f32.mrb[0].mxu0
        %v466 = vpop.f32.mrb[0].mxu0
        %467 = vdwg.mxu0
        %v468 = vld [vmem:[%s248] sm:$0x3f]
        %s469 = scalar_lea.vmem %s1, 8
        %v470 = vld [vmem:[%s469] sm:$0xf]
        %v472 = vcombine.high %v468, %v468
        %v474 = vunpack.c.l.s4 1983009808
        %v475 = vunpack.c.0.s8 %v474
        %v476 = vlaneseq
        %v477 = vshrl.u32 %v476, 7
        %v478 = vsub.s32 %v475, %v477
        %v479 = vrot.slane %v468, %v478
        %v481 = vunpack.c.l.s4 1983009808
        %v482 = vunpack.c.0.s8 %v481
        %v483 = vlaneseq
        %v484 = vshrl.u32 %v483, 7
        %v485 = vsub.s32 %v482, %v484
        %v486 = vrot.slane %v472, %v485
        %v487 = vcombine.high %v479, %v479
        %488 = vrot.lane.b32.xlu0 %v479, 126
        %v489 = vpop.permute.xlu0 %488
        %490 = vrot.lane.b32.xlu0 %v487, 126
        %v491 = vpop.permute.xlu0 %490
        %492 = vrot.lane.b32.xlu0 %v486, 126
        %v493 = vpop.permute.xlu0 %492
        %vm494 = vcmask 1031168
        %v495 = vsel %vm494, %v489, %v491
        %v496 = vsel %vm494, %v491, %v493
        %v498 = vsel %vm280, %v470, 0
        %v501 = vsel %vm284, %v495, 0
        %v504 = vsel %vm284, %v496, 0
        %v507 = vsel %vm284, %v493, 0
        %509 = vmatprep.subr.bf16.mxu0 %v504
        %510 = vmatpush1.bf16.msra.mxu0 %v501
        %511 = vmatprep.subr.bf16.mxu0 0
        %512 = vmatpush1.bf16.msra.mxu0 0
        %513 = vmatprep.subr.bf16.mxu0 0
        %514 = vmatpush1.bf16.msra.mxu0 0
        %515 = vmatprep.subr.bf16.mxu0 0
        %516 = vmatpush1.bf16.msra.mxu0 0
        %517 = vmatprep.subr.bf16.mxu0 0
        %518 = vmatpush1.bf16.msra.mxu0 0
        %519 = vmatprep.subr.bf16.mxu0 0
        %520 = vmatpush1.bf16.msra.mxu0 0
        %521 = vmatprep.subr.bf16.mxu0 0
        %522 = vmatpush1.bf16.msra.mxu0 0
        %523 = vmatprep.subr.bf16.mxu0 0
        %524 = vmatpush1.bf16.msra.mxu0 0
        %525 = vmatprep.subr.bf16.mxu0 0
        %526 = vmatpush1.bf16.msra.mxu0 0
        %527 = vmatprep.subr.bf16.mxu0 0
        %528 = vmatpush1.bf16.msra.mxu0 0
        %529 = vmatprep.subr.bf16.mxu0 0
        %530 = vmatpush1.bf16.msra.mxu0 0
        %531 = vmatprep.subr.bf16.mxu0 0
        %532 = vmatpush1.bf16.msra.mxu0 0
        %533 = vmatprep.subr.bf16.mxu0 0
        %534 = vmatpush1.bf16.msra.mxu0 0
        %535 = vmatprep.subr.bf16.mxu0 0
        %536 = vmatpush1.bf16.msra.mxu0 0
        %537 = vmatprep.subr.bf16.mxu0 0
        %538 = vmatpush1.bf16.msra.mxu0 0
        %539 = vmatprep.subr.bf16.mxu0 0
        %540 = vmatpush1.bf16.msra.mxu0 0
        %541 = vmatprep.mubr.bf16.mxu0 0
        %542 = vmatmul.mubr.bf16.gmra.mrb[0].mxu0 %v498
        %v543 = vpop.f32.mrb[0].mxu0
        %v544 = vadd.f32 0.0, %v543
        %v545 = vpop.f32.mrb[0].mxu0
        %v546 = vadd.f32 0.0, %v545
        %v547 = vpop.f32.mrb[0].mxu0
        %v548 = vpop.f32.mrb[0].mxu0
        %549 = vdwg.mxu0
        %550 = vmatprep.subr.bf16.mxu0 0
        %551 = vmatpush1.bf16.msra.mxu0 %v507
        %552 = vmatprep.subr.bf16.mxu0 0
        %553 = vmatpush1.bf16.msra.mxu0 0
        %554 = vmatprep.subr.bf16.mxu0 0
        %555 = vmatpush1.bf16.msra.mxu0 0
        %556 = vmatprep.subr.bf16.mxu0 0
        %557 = vmatpush1.bf16.msra.mxu0 0
        %558 = vmatprep.subr.bf16.mxu0 0
        %559 = vmatpush1.bf16.msra.mxu0 0
        %560 = vmatprep.subr.bf16.mxu0 0
        %561 = vmatpush1.bf16.msra.mxu0 0
        %562 = vmatprep.subr.bf16.mxu0 0
        %563 = vmatpush1.bf16.msra.mxu0 0
        %564 = vmatprep.subr.bf16.mxu0 0
        %565 = vmatpush1.bf16.msra.mxu0 0
        %566 = vmatprep.subr.bf16.mxu0 0
        %567 = vmatpush1.bf16.msra.mxu0 0
        %568 = vmatprep.subr.bf16.mxu0 0
        %569 = vmatpush1.bf16.msra.mxu0 0
        %570 = vmatprep.subr.bf16.mxu0 0
        %571 = vmatpush1.bf16.msra.mxu0 0
        %572 = vmatprep.subr.bf16.mxu0 0
        %573 = vmatpush1.bf16.msra.mxu0 0
        %574 = vmatprep.subr.bf16.mxu0 0
        %575 = vmatpush1.bf16.msra.mxu0 0
        %576 = vmatprep.subr.bf16.mxu0 0
        %577 = vmatpush1.bf16.msra.mxu0 0
        %578 = vmatprep.subr.bf16.mxu0 0
        %579 = vmatpush1.bf16.msra.mxu0 0
        %580 = vmatprep.subr.bf16.mxu0 0
        %581 = vmatpush1.bf16.msra.mxu0 0
        %582 = vmatprep.mubr.bf16.mxu0 0
        %583 = vmatmul.mubr.bf16.gmra.mrb[0].mxu0 %v498
        %v584 = vpop.f32.mrb[0].mxu0
        %v585 = vadd.f32 0.0, %v584
        %v586 = vpop.f32.mrb[0].mxu0
        %v587 = vpop.f32.mrb[0].mxu0
        %v588 = vpop.f32.mrb[0].mxu0
        %589 = vdwg.mxu0
        %v590 = vadd.f32 %v422, %v544
        %v591 = vadd.f32 %v424, %v546
        %v592 = vadd.f32 %v463, %v585
        %v593 = vld [vmem:[%s248] sm:$0x3f]
        %s594 = scalar_lea.vmem %s1, 12
        %v595 = vld [vmem:[%s594] sm:$0xf]
        %v597 = vcombine.high %v593, %v593
        %v599 = vunpack.c.l.s4 1983009808
        %v600 = vunpack.c.0.s8 %v599
        %v601 = vlaneseq
        %v602 = vshrl.u32 %v601, 7
        %v603 = vsub.s32 %v600, %v602
        %v604 = vrot.slane %v593, %v603
        %v606 = vunpack.c.l.s4 1983009808
        %v607 = vunpack.c.0.s8 %v606
        %v608 = vlaneseq
        %v609 = vshrl.u32 %v608, 7
        %v610 = vsub.s32 %v607, %v609
        %v611 = vrot.slane %v597, %v610
        %v612 = vcombine.high %v604, %v604
        %613 = vrot.lane.b32.xlu0 %v604, 110
        %v614 = vpop.permute.xlu0 %613
        %615 = vrot.lane.b32.xlu0 %v612, 110
        %v616 = vpop.permute.xlu0 %615
        %617 = vrot.lane.b32.xlu0 %v611, 110
        %v618 = vpop.permute.xlu0 %617
        %vm619 = vcmask 900096
        %v620 = vsel %vm619, %v614, %v616
        %v621 = vsel %vm619, %v616, %v618
        %v623 = vsel %vm280, %v595, 0
        %v626 = vsel %vm284, %v620, 0
        %v629 = vsel %vm284, %v621, 0
        %v632 = vsel %vm284, %v618, 0
        %634 = vmatprep.subr.bf16.mxu0 %v629
        %635 = vmatpush1.bf16.msra.mxu0 %v626
        %636 = vmatprep.subr.bf16.mxu0 0
        %637 = vmatpush1.bf16.msra.mxu0 0
        %638 = vmatprep.subr.bf16.mxu0 0
        %639 = vmatpush1.bf16.msra.mxu0 0
        %640 = vmatprep.subr.bf16.mxu0 0
        %641 = vmatpush1.bf16.msra.mxu0 0
        %642 = vmatprep.subr.bf16.mxu0 0
        %643 = vmatpush1.bf16.msra.mxu0 0
        %644 = vmatprep.subr.bf16.mxu0 0
        %645 = vmatpush1.bf16.msra.mxu0 0
        %646 = vmatprep.subr.bf16.mxu0 0
        %647 = vmatpush1.bf16.msra.mxu0 0
        %648 = vmatprep.subr.bf16.mxu0 0
        %649 = vmatpush1.bf16.msra.mxu0 0
        %650 = vmatprep.subr.bf16.mxu0 0
        %651 = vmatpush1.bf16.msra.mxu0 0
        %652 = vmatprep.subr.bf16.mxu0 0
        %653 = vmatpush1.bf16.msra.mxu0 0
        %654 = vmatprep.subr.bf16.mxu0 0
        %655 = vmatpush1.bf16.msra.mxu0 0
        %656 = vmatprep.subr.bf16.mxu0 0
        %657 = vmatpush1.bf16.msra.mxu0 0
        %658 = vmatprep.subr.bf16.mxu0 0
        %659 = vmatpush1.bf16.msra.mxu0 0
        %660 = vmatprep.subr.bf16.mxu0 0
        %661 = vmatpush1.bf16.msra.mxu0 0
        %662 = vmatprep.subr.bf16.mxu0 0
        %663 = vmatpush1.bf16.msra.mxu0 0
        %664 = vmatprep.subr.bf16.mxu0 0
        %665 = vmatpush1.bf16.msra.mxu0 0
        %666 = vmatprep.mubr.bf16.mxu0 0
        %667 = vmatmul.mubr.bf16.gmra.mrb[0].mxu0 %v623
        %v668 = vpop.f32.mrb[0].mxu0
        %v669 = vadd.f32 0.0, %v668
        %v670 = vpop.f32.mrb[0].mxu0
        %v671 = vadd.f32 0.0, %v670
        %v672 = vpop.f32.mrb[0].mxu0
        %v673 = vpop.f32.mrb[0].mxu0
        %674 = vdwg.mxu0
        %675 = vmatprep.subr.bf16.mxu0 0
        %676 = vmatpush1.bf16.msra.mxu0 %v632
        %677 = vmatprep.subr.bf16.mxu0 0
        %678 = vmatpush1.bf16.msra.mxu0 0
        %679 = vmatprep.subr.bf16.mxu0 0
        %680 = vmatpush1.bf16.msra.mxu0 0
        %681 = vmatprep.subr.bf16.mxu0 0
        %682 = vmatpush1.bf16.msra.mxu0 0
        %683 = vmatprep.subr.bf16.mxu0 0
        %684 = vmatpush1.bf16.msra.mxu0 0
        %685 = vmatprep.subr.bf16.mxu0 0
        %686 = vmatpush1.bf16.msra.mxu0 0
        %687 = vmatprep.subr.bf16.mxu0 0
        %688 = vmatpush1.bf16.msra.mxu0 0
        %689 = vmatprep.subr.bf16.mxu0 0
        %690 = vmatpush1.bf16.msra.mxu0 0
        %691 = vmatprep.subr.bf16.mxu0 0
        %692 = vmatpush1.bf16.msra.mxu0 0
        %693 = vmatprep.subr.bf16.mxu0 0
        %694 = vmatpush1.bf16.msra.mxu0 0
        %695 = vmatprep.subr.bf16.mxu0 0
        %696 = vmatpush1.bf16.msra.mxu0 0
        %697 = vmatprep.subr.bf16.mxu0 0
        %698 = vmatpush1.bf16.msra.mxu0 0
        %699 = vmatprep.subr.bf16.mxu0 0
        %700 = vmatpush1.bf16.msra.mxu0 0
        %701 = vmatprep.subr.bf16.mxu0 0
        %702 = vmatpush1.bf16.msra.mxu0 0
        %703 = vmatprep.subr.bf16.mxu0 0
        %704 = vmatpush1.bf16.msra.mxu0 0
        %705 = vmatprep.subr.bf16.mxu0 0
        %706 = vmatpush1.bf16.msra.mxu0 0
        %707 = vmatprep.mubr.bf16.mxu0 0
        %708 = vmatmul.mubr.bf16.gmra.mrb[0].mxu0 %v623
        %v709 = vpop.f32.mrb[0].mxu0
        %v710 = vadd.f32 0.0, %v709
        %v711 = vpop.f32.mrb[0].mxu0
        %v712 = vpop.f32.mrb[0].mxu0
        %v713 = vpop.f32.mrb[0].mxu0
        %714 = vdwg.mxu0
        %v715 = vadd.f32 %v590, %v669
        %v716 = vadd.f32 %v591, %v671
        %v717 = vadd.f32 %v592, %v710
        %v718 = vld [vmem:[%s248] sm:$0x3f]
        %s719 = scalar_lea.vmem %s1, 16
        %v720 = vld [vmem:[%s719] sm:$0xf]
        %v722 = vcombine.high %v718, %v718
        %v724 = vunpack.c.l.s4 1983009808
        %v725 = vunpack.c.0.s8 %v724
        %v726 = vlaneseq
        %v727 = vshrl.u32 %v726, 7
        %v728 = vsub.s32 %v725, %v727
        %v729 = vrot.slane %v718, %v728
        %v731 = vunpack.c.l.s4 1983009808
        %v732 = vunpack.c.0.s8 %v731
        %v733 = vlaneseq
        %v734 = vshrl.u32 %v733, 7
        %v735 = vsub.s32 %v732, %v734
        %v736 = vrot.slane %v722, %v735
        %v737 = vcombine.high %v729, %v729
        %738 = vrot.lane.b32.xlu0 %v729, 109
        %v739 = vpop.permute.xlu0 %738
        %740 = vrot.lane.b32.xlu0 %v737, 109
        %v741 = vpop.permute.xlu0 %740
        %742 = vrot.lane.b32.xlu0 %v736, 109
        %v743 = vpop.permute.xlu0 %742
        %vm744 = vcmask 891904
        %v745 = vsel %vm744, %v739, %v741
        %v746 = vsel %vm744, %v741, %v743
        %v748 = vsel %vm280, %v720, 0
        %v751 = vsel %vm284, %v745, 0
        %v754 = vsel %vm284, %v746, 0
        %v757 = vsel %vm284, %v743, 0
        %759 = vmatprep.subr.bf16.mxu0 %v754
        %760 = vmatpush1.bf16.msra.mxu0 %v751
        %761 = vmatprep.subr.bf16.mxu0 0
        %762 = vmatpush1.bf16.msra.mxu0 0
        %763 = vmatprep.subr.bf16.mxu0 0
        %764 = vmatpush1.bf16.msra.mxu0 0
        %765 = vmatprep.subr.bf16.mxu0 0
        %766 = vmatpush1.bf16.msra.mxu0 0
        %767 = vmatprep.subr.bf16.mxu0 0
        %768 = vmatpush1.bf16.msra.mxu0 0
        %769 = vmatprep.subr.bf16.mxu0 0
        %770 = vmatpush1.bf16.msra.mxu0 0
        %771 = vmatprep.subr.bf16.mxu0 0
        %772 = vmatpush1.bf16.msra.mxu0 0
        %773 = vmatprep.subr.bf16.mxu0 0
        %774 = vmatpush1.bf16.msra.mxu0 0
        %775 = vmatprep.subr.bf16.mxu0 0
        %776 = vmatpush1.bf16.msra.mxu0 0
        %777 = vmatprep.subr.bf16.mxu0 0
        %778 = vmatpush1.bf16.msra.mxu0 0
        %779 = vmatprep.subr.bf16.mxu0 0
        %780 = vmatpush1.bf16.msra.mxu0 0
        %781 = vmatprep.subr.bf16.mxu0 0
        %782 = vmatpush1.bf16.msra.mxu0 0
        %783 = vmatprep.subr.bf16.mxu0 0
        %784 = vmatpush1.bf16.msra.mxu0 0
        %785 = vmatprep.subr.bf16.mxu0 0
        %786 = vmatpush1.bf16.msra.mxu0 0
        %787 = vmatprep.subr.bf16.mxu0 0
        %788 = vmatpush1.bf16.msra.mxu0 0
        %789 = vmatprep.subr.bf16.mxu0 0
        %790 = vmatpush1.bf16.msra.mxu0 0
        %791 = vmatprep.mubr.bf16.mxu0 0
        %792 = vmatmul.mubr.bf16.gmra.mrb[0].mxu0 %v748
        %v793 = vpop.f32.mrb[0].mxu0
        %v794 = vadd.f32 0.0, %v793
        %v795 = vpop.f32.mrb[0].mxu0
        %v796 = vadd.f32 0.0, %v795
        %v797 = vpop.f32.mrb[0].mxu0
        %v798 = vpop.f32.mrb[0].mxu0
        %799 = vdwg.mxu0
        %800 = vmatprep.subr.bf16.mxu0 0
        %801 = vmatpush1.bf16.msra.mxu0 %v757
        %802 = vmatprep.subr.bf16.mxu0 0
        %803 = vmatpush1.bf16.msra.mxu0 0
        %804 = vmatprep.subr.bf16.mxu0 0
        %805 = vmatpush1.bf16.msra.mxu0 0
        %806 = vmatprep.subr.bf16.mxu0 0
        %807 = vmatpush1.bf16.msra.mxu0 0
        %808 = vmatprep.subr.bf16.mxu0 0
        %809 = vmatpush1.bf16.msra.mxu0 0
        %810 = vmatprep.subr.bf16.mxu0 0
        %811 = vmatpush1.bf16.msra.mxu0 0
        %812 = vmatprep.subr.bf16.mxu0 0
        %813 = vmatpush1.bf16.msra.mxu0 0
        %814 = vmatprep.subr.bf16.mxu0 0
        %815 = vmatpush1.bf16.msra.mxu0 0
        %816 = vmatprep.subr.bf16.mxu0 0
        %817 = vmatpush1.bf16.msra.mxu0 0
        %818 = vmatprep.subr.bf16.mxu0 0
        %819 = vmatpush1.bf16.msra.mxu0 0
        %820 = vmatprep.subr.bf16.mxu0 0
        %821 = vmatpush1.bf16.msra.mxu0 0
        %822 = vmatprep.subr.bf16.mxu0 0
        %823 = vmatpush1.bf16.msra.mxu0 0
        %824 = vmatprep.subr.bf16.mxu0 0
        %825 = vmatpush1.bf16.msra.mxu0 0
        %826 = vmatprep.subr.bf16.mxu0 0
        %827 = vmatpush1.bf16.msra.mxu0 0
        %828 = vmatprep.subr.bf16.mxu0 0
        %829 = vmatpush1.bf16.msra.mxu0 0
        %830 = vmatprep.subr.bf16.mxu0 0
        %831 = vmatpush1.bf16.msra.mxu0 0
        %832 = vmatprep.mubr.bf16.mxu0 0
        %833 = vmatmul.mubr.bf16.gmra.mrb[0].mxu0 %v748
        %v834 = vpop.f32.mrb[0].mxu0
        %v835 = vadd.f32 0.0, %v834
        %v836 = vpop.f32.mrb[0].mxu0
        %v837 = vpop.f32.mrb[0].mxu0
        %v838 = vpop.f32.mrb[0].mxu0
        %839 = vdwg.mxu0
        %v840 = vadd.f32 %v715, %v794
        %v841 = vadd.f32 %v716, %v796
        %v842 = vadd.f32 %v717, %v835
        %v843 = vld [vmem:[%s248] sm:$0x3f]
        %s844 = scalar_lea.vmem %s1, 20
        %v845 = vld [vmem:[%s844] sm:$0xf]
        %v847 = vcombine.high %v843, %v843
        %v849 = vunpack.c.l.s4 1983009808
        %v850 = vunpack.c.0.s8 %v849
        %v851 = vlaneseq
        %v852 = vshrl.u32 %v851, 7
        %v853 = vsub.s32 %v850, %v852
        %v854 = vrot.slane %v843, %v853
        %v856 = vunpack.c.l.s4 1983009808
        %v857 = vunpack.c.0.s8 %v856
        %v858 = vlaneseq
        %v859 = vshrl.u32 %v858, 7
        %v860 = vsub.s32 %v857, %v859
        %v861 = vrot.slane %v847, %v860
        %v862 = vcombine.high %v854, %v854
        %863 = vrot.lane.b32.xlu0 %v854, 108
        %v864 = vpop.permute.xlu0 %863
        %865 = vrot.lane.b32.xlu0 %v862, 108
        %v866 = vpop.permute.xlu0 %865
        %867 = vrot.lane.b32.xlu0 %v861, 108
        %v868 = vpop.permute.xlu0 %867
        %vm869 = vcmask 883712
        %v870 = vsel %vm869, %v864, %v866
        %v871 = vsel %vm869, %v866, %v868
        %v873 = vsel %vm280, %v845, 0
        %v876 = vsel %vm284, %v870, 0
        %v879 = vsel %vm284, %v871, 0
        %v882 = vsel %vm284, %v868, 0
        %884 = vmatprep.subr.bf16.mxu0 %v879
        %885 = vmatpush1.bf16.msra.mxu0 %v876
        %886 = vmatprep.subr.bf16.mxu0 0
        %887 = vmatpush1.bf16.msra.mxu0 0
        %888 = vmatprep.subr.bf16.mxu0 0
        %889 = vmatpush1.bf16.msra.mxu0 0
        %890 = vmatprep.subr.bf16.mxu0 0
        %891 = vmatpush1.bf16.msra.mxu0 0
        %892 = vmatprep.subr.bf16.mxu0 0
        %893 = vmatpush1.bf16.msra.mxu0 0
        %894 = vmatprep.subr.bf16.mxu0 0
        %895 = vmatpush1.bf16.msra.mxu0 0
        %896 = vmatprep.subr.bf16.mxu0 0
        %897 = vmatpush1.bf16.msra.mxu0 0
        %898 = vmatprep.subr.bf16.mxu0 0
        %899 = vmatpush1.bf16.msra.mxu0 0
        %900 = vmatprep.subr.bf16.mxu0 0
        %901 = vmatpush1.bf16.msra.mxu0 0
        %902 = vmatprep.subr.bf16.mxu0 0
        %903 = vmatpush1.bf16.msra.mxu0 0
        %904 = vmatprep.subr.bf16.mxu0 0
        %905 = vmatpush1.bf16.msra.mxu0 0
        %906 = vmatprep.subr.bf16.mxu0 0
        %907 = vmatpush1.bf16.msra.mxu0 0
        %908 = vmatprep.subr.bf16.mxu0 0
        %909 = vmatpush1.bf16.msra.mxu0 0
        %910 = vmatprep.subr.bf16.mxu0 0
        %911 = vmatpush1.bf16.msra.mxu0 0
        %912 = vmatprep.subr.bf16.mxu0 0
        %913 = vmatpush1.bf16.msra.mxu0 0
        %914 = vmatprep.subr.bf16.mxu0 0
        %915 = vmatpush1.bf16.msra.mxu0 0
        %916 = vmatprep.mubr.bf16.mxu0 0
        %917 = vmatmul.mubr.bf16.gmra.mrb[0].mxu0 %v873
        %v918 = vpop.f32.mrb[0].mxu0
        %v919 = vadd.f32 0.0, %v918
        %v920 = vpop.f32.mrb[0].mxu0
        %v921 = vadd.f32 0.0, %v920
        %v922 = vpop.f32.mrb[0].mxu0
        %v923 = vpop.f32.mrb[0].mxu0
        %924 = vdwg.mxu0
        %925 = vmatprep.subr.bf16.mxu0 0
        %926 = vmatpush1.bf16.msra.mxu0 %v882
        %927 = vmatprep.subr.bf16.mxu0 0
        %928 = vmatpush1.bf16.msra.mxu0 0
        %929 = vmatprep.subr.bf16.mxu0 0
        %930 = vmatpush1.bf16.msra.mxu0 0
        %931 = vmatprep.subr.bf16.mxu0 0
        %932 = vmatpush1.bf16.msra.mxu0 0
        %933 = vmatprep.subr.bf16.mxu0 0
        %934 = vmatpush1.bf16.msra.mxu0 0
        %935 = vmatprep.subr.bf16.mxu0 0
        %936 = vmatpush1.bf16.msra.mxu0 0
        %937 = vmatprep.subr.bf16.mxu0 0
        %938 = vmatpush1.bf16.msra.mxu0 0
        %939 = vmatprep.subr.bf16.mxu0 0
        %940 = vmatpush1.bf16.msra.mxu0 0
        %941 = vmatprep.subr.bf16.mxu0 0
        %942 = vmatpush1.bf16.msra.mxu0 0
        %943 = vmatprep.subr.bf16.mxu0 0
        %944 = vmatpush1.bf16.msra.mxu0 0
        %945 = vmatprep.subr.bf16.mxu0 0
        %946 = vmatpush1.bf16.msra.mxu0 0
        %947 = vmatprep.subr.bf16.mxu0 0
        %948 = vmatpush1.bf16.msra.mxu0 0
        %949 = vmatprep.subr.bf16.mxu0 0
        %950 = vmatpush1.bf16.msra.mxu0 0
        %951 = vmatprep.subr.bf16.mxu0 0
        %952 = vmatpush1.bf16.msra.mxu0 0
        %953 = vmatprep.subr.bf16.mxu0 0
        %954 = vmatpush1.bf16.msra.mxu0 0
        %955 = vmatprep.subr.bf16.mxu0 0
        %956 = vmatpush1.bf16.msra.mxu0 0
        %957 = vmatprep.mubr.bf16.mxu0 0
        %958 = vmatmul.mubr.bf16.gmra.mrb[0].mxu0 %v873
        %v959 = vpop.f32.mrb[0].mxu0
        %v960 = vadd.f32 0.0, %v959
        %v961 = vpop.f32.mrb[0].mxu0
        %v962 = vpop.f32.mrb[0].mxu0
        %v963 = vpop.f32.mrb[0].mxu0
        %964 = vdwg.mxu0
        %v965 = vadd.f32 %v840, %v919
        %v966 = vadd.f32 %v841, %v921
        %v967 = vadd.f32 %v842, %v960
        %v968 = vld [vmem:[%s248] sm:$0x3f]
        %s969 = scalar_lea.vmem %s1, 24
        %v970 = vld [vmem:[%s969] sm:$0xf]
        %v972 = vcombine.high %v968, %v968
        %v974 = vunpack.c.l.s4 1983009808
        %v975 = vunpack.c.0.s8 %v974
        %v976 = vlaneseq
        %v977 = vshrl.u32 %v976, 7
        %v978 = vsub.s32 %v975, %v977
        %v979 = vrot.slane %v968, %v978
        %v981 = vunpack.c.l.s4 1983009808
        %v982 = vunpack.c.0.s8 %v981
        %v983 = vlaneseq
        %v984 = vshrl.u32 %v983, 7
        %v985 = vsub.s32 %v982, %v984
        %v986 = vrot.slane %v972, %v985
        %v987 = vcombine.high %v979, %v979
        %988 = vrot.lane.b32.xlu0 %v979, 92
        %v989 = vpop.permute.xlu0 %988
        %990 = vrot.lane.b32.xlu0 %v987, 92
        %v991 = vpop.permute.xlu0 %990
        %992 = vrot.lane.b32.xlu0 %v986, 92
        %v993 = vpop.permute.xlu0 %992
        %vm994 = vcmask 752640
        %v995 = vsel %vm994, %v989, %v991
        %v996 = vsel %vm994, %v991, %v993
        %v998 = vsel %vm280, %v970, 0
        %v1001 = vsel %vm284, %v995, 0
        %v1004 = vsel %vm284, %v996, 0
        %v1007 = vsel %vm284, %v993, 0
        %1009 = vmatprep.subr.bf16.mxu0 %v1004
        %1010 = vmatpush1.bf16.msra.mxu0 %v1001
        %1011 = vmatprep.subr.bf16.mxu0 0
        %1012 = vmatpush1.bf16.msra.mxu0 0
        %1013 = vmatprep.subr.bf16.mxu0 0
        %1014 = vmatpush1.bf16.msra.mxu0 0
        %1015 = vmatprep.subr.bf16.mxu0 0
        %1016 = vmatpush1.bf16.msra.mxu0 0
        %1017 = vmatprep.subr.bf16.mxu0 0
        %1018 = vmatpush1.bf16.msra.mxu0 0
        %1019 = vmatprep.subr.bf16.mxu0 0
        %1020 = vmatpush1.bf16.msra.mxu0 0
        %1021 = vmatprep.subr.bf16.mxu0 0
        %1022 = vmatpush1.bf16.msra.mxu0 0
        %1023 = vmatprep.subr.bf16.mxu0 0
        %1024 = vmatpush1.bf16.msra.mxu0 0
        %1025 = vmatprep.subr.bf16.mxu0 0
        %1026 = vmatpush1.bf16.msra.mxu0 0
        %1027 = vmatprep.subr.bf16.mxu0 0
        %1028 = vmatpush1.bf16.msra.mxu0 0
        %1029 = vmatprep.subr.bf16.mxu0 0
        %1030 = vmatpush1.bf16.msra.mxu0 0
        %1031 = vmatprep.subr.bf16.mxu0 0
        %1032 = vmatpush1.bf16.msra.mxu0 0
        %1033 = vmatprep.subr.bf16.mxu0 0
        %1034 = vmatpush1.bf16.msra.mxu0 0
        %1035 = vmatprep.subr.bf16.mxu0 0
        %1036 = vmatpush1.bf16.msra.mxu0 0
        %1037 = vmatprep.subr.bf16.mxu0 0
        %1038 = vmatpush1.bf16.msra.mxu0 0
        %1039 = vmatprep.subr.bf16.mxu0 0
        %1040 = vmatpush1.bf16.msra.mxu0 0
        %1041 = vmatprep.mubr.bf16.mxu0 0
        %1042 = vmatmul.mubr.bf16.gmra.mrb[0].mxu0 %v998
        %v1043 = vpop.f32.mrb[0].mxu0
        %v1044 = vadd.f32 0.0, %v1043
        %v1045 = vpop.f32.mrb[0].mxu0
        %v1046 = vadd.f32 0.0, %v1045
        %v1047 = vpop.f32.mrb[0].mxu0
        %v1048 = vpop.f32.mrb[0].mxu0
        %1049 = vdwg.mxu0
        %1050 = vmatprep.subr.bf16.mxu0 0
        %1051 = vmatpush1.bf16.msra.mxu0 %v1007
        %1052 = vmatprep.subr.bf16.mxu0 0
        %1053 = vmatpush1.bf16.msra.mxu0 0
        %1054 = vmatprep.subr.bf16.mxu0 0
        %1055 = vmatpush1.bf16.msra.mxu0 0
        %1056 = vmatprep.subr.bf16.mxu0 0
        %1057 = vmatpush1.bf16.msra.mxu0 0
        %1058 = vmatprep.subr.bf16.mxu0 0
        %1059 = vmatpush1.bf16.msra.mxu0 0
        %1060 = vmatprep.subr.bf16.mxu0 0
        %1061 = vmatpush1.bf16.msra.mxu0 0
        %1062 = vmatprep.subr.bf16.mxu0 0
        %1063 = vmatpush1.bf16.msra.mxu0 0
        %1064 = vmatprep.subr.bf16.mxu0 0
        %1065 = vmatpush1.bf16.msra.mxu0 0
        %1066 = vmatprep.subr.bf16.mxu0 0
        %1067 = vmatpush1.bf16.msra.mxu0 0
        %1068 = vmatprep.subr.bf16.mxu0 0
        %1069 = vmatpush1.bf16.msra.mxu0 0
        %1070 = vmatprep.subr.bf16.mxu0 0
        %1071 = vmatpush1.bf16.msra.mxu0 0
        %1072 = vmatprep.subr.bf16.mxu0 0
        %1073 = vmatpush1.bf16.msra.mxu0 0
        %1074 = vmatprep.subr.bf16.mxu0 0
        %1075 = vmatpush1.bf16.msra.mxu0 0
        %1076 = vmatprep.subr.bf16.mxu0 0
        %1077 = vmatpush1.bf16.msra.mxu0 0
        %1078 = vmatprep.subr.bf16.mxu0 0
        %1079 = vmatpush1.bf16.msra.mxu0 0
        %1080 = vmatprep.subr.bf16.mxu0 0
        %1081 = vmatpush1.bf16.msra.mxu0 0
        %1082 = vmatprep.mubr.bf16.mxu0 0
        %1083 = vmatmul.mubr.bf16.gmra.mrb[0].mxu0 %v998
        %v1084 = vpop.f32.mrb[0].mxu0
        %v1085 = vadd.f32 0.0, %v1084
        %v1086 = vpop.f32.mrb[0].mxu0
        %v1087 = vpop.f32.mrb[0].mxu0
        %v1088 = vpop.f32.mrb[0].mxu0
        %1089 = vdwg.mxu0
        %v1090 = vadd.f32 %v965, %v1044
        %v1091 = vadd.f32 %v966, %v1046
        %v1092 = vadd.f32 %v967, %v1085
        %v1093 = vld [vmem:[%s248] sm:$0x3f]
        %s1094 = scalar_lea.vmem %s1, 28
        %v1095 = vld [vmem:[%s1094] sm:$0xf]
        %v1097 = vcombine.high %v1093, %v1093
        %v1099 = vunpack.c.l.s4 1983009808
        %v1100 = vunpack.c.0.s8 %v1099
        %v1101 = vlaneseq
        %v1102 = vshrl.u32 %v1101, 7
        %v1103 = vsub.s32 %v1100, %v1102
        %v1104 = vrot.slane %v1093, %v1103
        %v1106 = vunpack.c.l.s4 1983009808
        %v1107 = vunpack.c.0.s8 %v1106
        %v1108 = vlaneseq
        %v1109 = vshrl.u32 %v1108, 7
        %v1110 = vsub.s32 %v1107, %v1109
        %v1111 = vrot.slane %v1097, %v1110
        %v1112 = vcombine.high %v1104, %v1104
        %1113 = vrot.lane.b32.xlu0 %v1104, 91
        %v1114 = vpop.permute.xlu0 %1113
        %1115 = vrot.lane.b32.xlu0 %v1112, 91
        %v1116 = vpop.permute.xlu0 %1115
        %1117 = vrot.lane.b32.xlu0 %v1111, 91
        %v1118 = vpop.permute.xlu0 %1117
        %vm1119 = vcmask 744448
        %v1120 = vsel %vm1119, %v1114, %v1116
        %v1121 = vsel %vm1119, %v1116, %v1118
        %v1123 = vsel %vm280, %v1095, 0
        %v1126 = vsel %vm284, %v1120, 0
        %v1129 = vsel %vm284, %v1121, 0
        %v1132 = vsel %vm284, %v1118, 0
        %1134 = vmatprep.subr.bf16.mxu0 %v1129
        %1135 = vmatpush1.bf16.msra.mxu0 %v1126
        %1136 = vmatprep.subr.bf16.mxu0 0
        %1137 = vmatpush1.bf16.msra.mxu0 0
        %1138 = vmatprep.subr.bf16.mxu0 0
        %1139 = vmatpush1.bf16.msra.mxu0 0
        %1140 = vmatprep.subr.bf16.mxu0 0
        %1141 = vmatpush1.bf16.msra.mxu0 0
        %1142 = vmatprep.subr.bf16.mxu0 0
        %1143 = vmatpush1.bf16.msra.mxu0 0
        %1144 = vmatprep.subr.bf16.mxu0 0
        %1145 = vmatpush1.bf16.msra.mxu0 0
        %1146 = vmatprep.subr.bf16.mxu0 0
        %1147 = vmatpush1.bf16.msra.mxu0 0
        %1148 = vmatprep.subr.bf16.mxu0 0
        %1149 = vmatpush1.bf16.msra.mxu0 0
        %1150 = vmatprep.subr.bf16.mxu0 0
        %1151 = vmatpush1.bf16.msra.mxu0 0
        %1152 = vmatprep.subr.bf16.mxu0 0
        %1153 = vmatpush1.bf16.msra.mxu0 0
        %1154 = vmatprep.subr.bf16.mxu0 0
        %1155 = vmatpush1.bf16.msra.mxu0 0
        %1156 = vmatprep.subr.bf16.mxu0 0
        %1157 = vmatpush1.bf16.msra.mxu0 0
        %1158 = vmatprep.subr.bf16.mxu0 0
        %1159 = vmatpush1.bf16.msra.mxu0 0
        %1160 = vmatprep.subr.bf16.mxu0 0
        %1161 = vmatpush1.bf16.msra.mxu0 0
        %1162 = vmatprep.subr.bf16.mxu0 0
        %1163 = vmatpush1.bf16.msra.mxu0 0
        %1164 = vmatprep.subr.bf16.mxu0 0
        %1165 = vmatpush1.bf16.msra.mxu0 0
        %1166 = vmatprep.mubr.bf16.mxu0 0
        %1167 = vmatmul.mubr.bf16.gmra.mrb[0].mxu0 %v1123
        %v1168 = vpop.f32.mrb[0].mxu0
        %v1169 = vadd.f32 0.0, %v1168
        %v1170 = vpop.f32.mrb[0].mxu0
        %v1171 = vadd.f32 0.0, %v1170
        %v1172 = vpop.f32.mrb[0].mxu0
        %v1173 = vpop.f32.mrb[0].mxu0
        %1174 = vdwg.mxu0
        %1175 = vmatprep.subr.bf16.mxu0 0
        %1176 = vmatpush1.bf16.msra.mxu0 %v1132
        %1177 = vmatprep.subr.bf16.mxu0 0
        %1178 = vmatpush1.bf16.msra.mxu0 0
        %1179 = vmatprep.subr.bf16.mxu0 0
        %1180 = vmatpush1.bf16.msra.mxu0 0
        %1181 = vmatprep.subr.bf16.mxu0 0
        %1182 = vmatpush1.bf16.msra.mxu0 0
        %1183 = vmatprep.subr.bf16.mxu0 0
        %1184 = vmatpush1.bf16.msra.mxu0 0
        %1185 = vmatprep.subr.bf16.mxu0 0
        %1186 = vmatpush1.bf16.msra.mxu0 0
        %1187 = vmatprep.subr.bf16.mxu0 0
        %1188 = vmatpush1.bf16.msra.mxu0 0
        %1189 = vmatprep.subr.bf16.mxu0 0
        %1190 = vmatpush1.bf16.msra.mxu0 0
        %1191 = vmatprep.subr.bf16.mxu0 0
        %1192 = vmatpush1.bf16.msra.mxu0 0
        %1193 = vmatprep.subr.bf16.mxu0 0
        %1194 = vmatpush1.bf16.msra.mxu0 0
        %1195 = vmatprep.subr.bf16.mxu0 0
        %1196 = vmatpush1.bf16.msra.mxu0 0
        %1197 = vmatprep.subr.bf16.mxu0 0
        %1198 = vmatpush1.bf16.msra.mxu0 0
        %1199 = vmatprep.subr.bf16.mxu0 0
        %1200 = vmatpush1.bf16.msra.mxu0 0
        %1201 = vmatprep.subr.bf16.mxu0 0
        %1202 = vmatpush1.bf16.msra.mxu0 0
        %1203 = vmatprep.subr.bf16.mxu0 0
        %1204 = vmatpush1.bf16.msra.mxu0 0
        %1205 = vmatprep.subr.bf16.mxu0 0
        %1206 = vmatpush1.bf16.msra.mxu0 0
        %1207 = vmatprep.mubr.bf16.mxu0 0
        %1208 = vmatmul.mubr.bf16.gmra.mrb[0].mxu0 %v1123
        %v1209 = vpop.f32.mrb[0].mxu0
        %v1210 = vadd.f32 0.0, %v1209
        %v1211 = vpop.f32.mrb[0].mxu0
        %v1212 = vpop.f32.mrb[0].mxu0
        %v1213 = vpop.f32.mrb[0].mxu0
        %1214 = vdwg.mxu0
        %v1215 = vadd.f32 %v1090, %v1169
        %v1216 = vadd.f32 %v1091, %v1171
        %v1217 = vadd.f32 %v1092, %v1210
        %v1218 = vld [vmem:[%s248] sm:$0x3f]
        %s1219 = scalar_lea.vmem %s1, 32
        %v1220 = vld [vmem:[%s1219] sm:$0xf]
        %v1222 = vcombine.high %v1218, %v1218
        %v1224 = vunpack.c.l.s4 1983009808
        %v1225 = vunpack.c.0.s8 %v1224
        %v1226 = vlaneseq
        %v1227 = vshrl.u32 %v1226, 7
        %v1228 = vsub.s32 %v1225, %v1227
        %v1229 = vrot.slane %v1218, %v1228
        %v1231 = vunpack.c.l.s4 1983009808
        %v1232 = vunpack.c.0.s8 %v1231
        %v1233 = vlaneseq
        %v1234 = vshrl.u32 %v1233, 7
        %v1235 = vsub.s32 %v1232, %v1234
        %v1236 = vrot.slane %v1222, %v1235
        %v1237 = vcombine.high %v1229, %v1229
        %1238 = vrot.lane.b32.xlu0 %v1229, 90
        %v1239 = vpop.permute.xlu0 %1238
        %1240 = vrot.lane.b32.xlu0 %v1237, 90
        %v1241 = vpop.permute.xlu0 %1240
        %1242 = vrot.lane.b32.xlu0 %v1236, 90
        %v1243 = vpop.permute.xlu0 %1242
        %vm1244 = vcmask 736256
        %v1245 = vsel %vm1244, %v1239, %v1241
        %v1246 = vsel %vm1244, %v1241, %v1243
        %v1248 = vsel %vm280, %v1220, 0
        %v1251 = vsel %vm284, %v1245, 0
        %v1254 = vsel %vm284, %v1246, 0
        %v1257 = vsel %vm284, %v1243, 0
        %1259 = vmatprep.subr.bf16.mxu0 %v1254
        %1260 = vmatpush1.bf16.msra.mxu0 %v1251
        %1261 = vmatprep.subr.bf16.mxu0 0
        %1262 = vmatpush1.bf16.msra.mxu0 0
        %1263 = vmatprep.subr.bf16.mxu0 0
        %1264 = vmatpush1.bf16.msra.mxu0 0
        %1265 = vmatprep.subr.bf16.mxu0 0
        %1266 = vmatpush1.bf16.msra.mxu0 0
        %1267 = vmatprep.subr.bf16.mxu0 0
        %1268 = vmatpush1.bf16.msra.mxu0 0
        %1269 = vmatprep.subr.bf16.mxu0 0
        %1270 = vmatpush1.bf16.msra.mxu0 0
        %1271 = vmatprep.subr.bf16.mxu0 0
        %1272 = vmatpush1.bf16.msra.mxu0 0
        %1273 = vmatprep.subr.bf16.mxu0 0
        %1274 = vmatpush1.bf16.msra.mxu0 0
        %1275 = vmatprep.subr.bf16.mxu0 0
        %1276 = vmatpush1.bf16.msra.mxu0 0
        %1277 = vmatprep.subr.bf16.mxu0 0
        %1278 = vmatpush1.bf16.msra.mxu0 0
        %1279 = vmatprep.subr.bf16.mxu0 0
        %1280 = vmatpush1.bf16.msra.mxu0 0
        %1281 = vmatprep.subr.bf16.mxu0 0
        %1282 = vmatpush1.bf16.msra.mxu0 0
        %1283 = vmatprep.subr.bf16.mxu0 0
        %1284 = vmatpush1.bf16.msra.mxu0 0
        %1285 = vmatprep.subr.bf16.mxu0 0
        %1286 = vmatpush1.bf16.msra.mxu0 0
        %1287 = vmatprep.subr.bf16.mxu0 0
        %1288 = vmatpush1.bf16.msra.mxu0 0
        %1289 = vmatprep.subr.bf16.mxu0 0
        %1290 = vmatpush1.bf16.msra.mxu0 0
        %1291 = vmatprep.mubr.bf16.mxu0 0
        %1292 = vmatmul.mubr.bf16.gmra.mrb[0].mxu0 %v1248
        %v1293 = vpop.f32.mrb[0].mxu0
        %v1294 = vadd.f32 0.0, %v1293
        %v1295 = vpop.f32.mrb[0].mxu0
        %v1296 = vadd.f32 0.0, %v1295
        %v1297 = vpop.f32.mrb[0].mxu0
        %v1298 = vpop.f32.mrb[0].mxu0
        %1299 = vdwg.mxu0
        %1300 = vmatprep.subr.bf16.mxu0 0
        %1301 = vmatpush1.bf16.msra.mxu0 %v1257
        %1302 = vmatprep.subr.bf16.mxu0 0
        %1303 = vmatpush1.bf16.msra.mxu0 0
        %1304 = vmatprep.subr.bf16.mxu0 0
        %1305 = vmatpush1.bf16.msra.mxu0 0
        %1306 = vmatprep.subr.bf16.mxu0 0
        %1307 = vmatpush1.bf16.msra.mxu0 0
        %1308 = vmatprep.subr.bf16.mxu0 0
        %1309 = vmatpush1.bf16.msra.mxu0 0
        %1310 = vmatprep.subr.bf16.mxu0 0
        %1311 = vmatpush1.bf16.msra.mxu0 0
        %1312 = vmatprep.subr.bf16.mxu0 0
        %1313 = vmatpush1.bf16.msra.mxu0 0
        %1314 = vmatprep.subr.bf16.mxu0 0
        %1315 = vmatpush1.bf16.msra.mxu0 0
        %1316 = vmatprep.subr.bf16.mxu0 0
        %1317 = vmatpush1.bf16.msra.mxu0 0
        %1318 = vmatprep.subr.bf16.mxu0 0
        %1319 = vmatpush1.bf16.msra.mxu0 0
        %1320 = vmatprep.subr.bf16.mxu0 0
        %1321 = vmatpush1.bf16.msra.mxu0 0
        %1322 = vmatprep.subr.bf16.mxu0 0
        %1323 = vmatpush1.bf16.msra.mxu0 0
        %1324 = vmatprep.subr.bf16.mxu0 0
        %1325 = vmatpush1.bf16.msra.mxu0 0
        %1326 = vmatprep.subr.bf16.mxu0 0
        %1327 = vmatpush1.bf16.msra.mxu0 0
        %1328 = vmatprep.subr.bf16.mxu0 0
        %1329 = vmatpush1.bf16.msra.mxu0 0
        %1330 = vmatprep.subr.bf16.mxu0 0
        %1331 = vmatpush1.bf16.msra.mxu0 0
        %1332 = vmatprep.mubr.bf16.mxu0 0
        %1333 = vmatmul.mubr.bf16.gmra.mrb[0].mxu0 %v1248
        %v1334 = vpop.f32.mrb[0].mxu0
        %v1335 = vadd.f32 0.0, %v1334
        %v1336 = vpop.f32.mrb[0].mxu0
        %v1337 = vpop.f32.mrb[0].mxu0
        %v1338 = vpop.f32.mrb[0].mxu0
        %1339 = vdwg.mxu0
        %v1340 = vadd.f32 %v1215, %v1294
        %v1341 = vadd.f32 %v1216, %v1296
        %v1342 = vadd.f32 %v1217, %v1335
        %v1343 = vld [vmem:[%s2] sm:$0xff]
        %1345 = vset.pattern.permute.xlu0 0
        %1346 = vperm.xlu0 %1345, %v1343
        %v1347 = vpop.permute.xlu0 %1346
        %v1349 = vadd.f32 %v1340, %v1347
        %v1350 = vadd.f32 %v1341, %v1347
        %v1351 = vadd.f32 %v1342, %v1347
        %v1352 = vmax.f32 %v1349, 0.0
        %v1353 = vmax.f32 %v1350, 0.0
        %v1354 = vmax.f32 %v1351, 0.0
        %v1355 = vld [vmem:[%s3] sm:$0x7]
        %v1357 = vlaneseq
        %v1358 = vshrl.u32 %v1357, 7
        %v1359 = vsub.s32 0, %v1358
        %v1360 = vrot.slane %v1355, %v1359
        %v1361 = vlaneseq
        %v1362 = vshrl.u32 %v1361, 7
        %v1363 = vsub.s32 1, %v1362
        %v1364 = vrot.slane %v1355, %v1363
        %v1365 = vlaneseq
        %v1366 = vshrl.u32 %v1365, 7
        %v1367 = vsub.s32 2, %v1366
        %v1368 = vrot.slane %v1355, %v1367
        %vm1371 = vcmask 556032
        %v1372 = vsel %vm1371, %v1368, 0
        %v1375 = vsel %vm1371, %v1354, 0
        %1377 = vmatprep.subr.mxu0 %v1353
        %1378 = vmatpush1.xpose.msra.mxu0 %v1352
        %1379 = vmatprep.subr.mxu0 0.0
        %1380 = vmatpush1.xpose.msra.mxu0 0.0
        %1381 = vmatprep.subr.mxu0 0.0
        %1382 = vmatpush1.xpose.msra.mxu0 0.0
        %1383 = vmatprep.subr.mxu0 0.0
        %1384 = vmatpush1.xpose.msra.mxu0 0.0
        %1385 = vmatprep.subr.mxu0 0.0
        %1386 = vmatpush1.xpose.msra.mxu0 0.0
        %1387 = vmatprep.subr.mxu0 0.0
        %1388 = vmatpush1.xpose.msra.mxu0 0.0
        %1389 = vmatprep.subr.mxu0 0.0
        %1390 = vmatpush1.xpose.msra.mxu0 0.0
        %1391 = vmatprep.subr.mxu0 0.0
        %1392 = vmatpush1.xpose.msra.mxu0 0.0
        %1393 = vmatprep.subr.mxu0 0.0
        %1394 = vmatpush1.xpose.msra.mxu0 0.0
        %1395 = vmatprep.subr.mxu0 0.0
        %1396 = vmatpush1.xpose.msra.mxu0 0.0
        %1397 = vmatprep.subr.mxu0 0.0
        %1398 = vmatpush1.xpose.msra.mxu0 0.0
        %1399 = vmatprep.subr.mxu0 0.0
        %1400 = vmatpush1.xpose.msra.mxu0 0.0
        %1401 = vmatprep.subr.mxu0 0.0
        %1402 = vmatpush1.xpose.msra.mxu0 0.0
        %1403 = vmatprep.subr.mxu0 0.0
        %1404 = vmatpush1.xpose.msra.mxu0 0.0
        %1405 = vmatprep.subr.mxu0 0.0
        %1406 = vmatpush1.xpose.msra.mxu0 0.0
        %1407 = vmatprep.subr.mxu0 0.0
        %1408 = vmatpush1.xpose.msra.mxu0 0.0
        %1409 = vmatprep.subr.mxu0 0.0
        %1410 = vmatpush1.xpose.msra.mxu0 0.0
        %1411 = vmatprep.subr.mxu0 0.0
        %1412 = vmatpush1.xpose.msra.mxu0 0.0
        %1413 = vmatprep.subr.mxu0 0.0
        %1414 = vmatpush1.xpose.msra.mxu0 0.0
        %1415 = vmatprep.subr.mxu0 0.0
        %1416 = vmatpush1.xpose.msra.mxu0 0.0
        %1417 = vmatprep.subr.mxu0 0.0
        %1418 = vmatpush1.xpose.msra.mxu0 0.0
        %1419 = vmatprep.subr.mxu0 0.0
        %1420 = vmatpush1.xpose.msra.mxu0 0.0
        %1421 = vmatprep.subr.mxu0 0.0
        %1422 = vmatpush1.xpose.msra.mxu0 0.0
        %1423 = vmatprep.subr.mxu0 0.0
        %1424 = vmatpush1.xpose.msra.mxu0 0.0
        %1425 = vmatprep.subr.mxu0 0.0
        %1426 = vmatpush1.xpose.msra.mxu0 0.0
        %1427 = vmatprep.subr.mxu0 0.0
        %1428 = vmatpush1.xpose.msra.mxu0 0.0
        %1429 = vmatprep.subr.mxu0 0.0
        %1430 = vmatpush1.xpose.msra.mxu0 0.0
        %1431 = vmatprep.subr.mxu0 0.0
        %1432 = vmatpush1.xpose.msra.mxu0 0.0
        %1433 = vmatprep.subr.mxu0 0.0
        %1434 = vmatpush1.xpose.msra.mxu0 0.0
        %1435 = vmatprep.subr.mxu0 0.0
        %1436 = vmatpush1.xpose.msra.mxu0 0.0
        %1437 = vmatprep.subr.mxu0 0.0
        %1438 = vmatpush1.xpose.msra.mxu0 0.0
        %1439 = vmatprep.subr.mxu0 0.0
        %1440 = vmatpush1.xpose.msra.mxu0 0.0
        %1441 = vmatprep.mubr.f32.mxu0 %v1364
        %1442 = vmatmul.mubr.f32.gmra.mrb[0].mxu0 %v1360
        %v1443 = vpop.f32.mrb[0].mxu0
        %v1444 = vadd.f32 0.0, %v1443
        %v1445 = vpop.f32.mrb[0].mxu0
        %1446 = vdwg.mxu0
        %1447 = vmatprep.subr.mxu0 0.0
        %1448 = vmatpush1.xpose.msra.mxu0 %v1375
        %1449 = vmatprep.subr.mxu0 0.0
        %1450 = vmatpush1.xpose.msra.mxu0 0.0
        %1451 = vmatprep.subr.mxu0 0.0
        %1452 = vmatpush1.xpose.msra.mxu0 0.0
        %1453 = vmatprep.subr.mxu0 0.0
        %1454 = vmatpush1.xpose.msra.mxu0 0.0
        %1455 = vmatprep.subr.mxu0 0.0
        %1456 = vmatpush1.xpose.msra.mxu0 0.0
        %1457 = vmatprep.subr.mxu0 0.0
        %1458 = vmatpush1.xpose.msra.mxu0 0.0
        %1459 = vmatprep.subr.mxu0 0.0
        %1460 = vmatpush1.xpose.msra.mxu0 0.0
        %1461 = vmatprep.subr.mxu0 0.0
        %1462 = vmatpush1.xpose.msra.mxu0 0.0
        %1463 = vmatprep.subr.mxu0 0.0
        %1464 = vmatpush1.xpose.msra.mxu0 0.0
        %1465 = vmatprep.subr.mxu0 0.0
        %1466 = vmatpush1.xpose.msra.mxu0 0.0
        %1467 = vmatprep.subr.mxu0 0.0
        %1468 = vmatpush1.xpose.msra.mxu0 0.0
        %1469 = vmatprep.subr.mxu0 0.0
        %1470 = vmatpush1.xpose.msra.mxu0 0.0
        %1471 = vmatprep.subr.mxu0 0.0
        %1472 = vmatpush1.xpose.msra.mxu0 0.0
        %1473 = vmatprep.subr.mxu0 0.0
        %1474 = vmatpush1.xpose.msra.mxu0 0.0
        %1475 = vmatprep.subr.mxu0 0.0
        %1476 = vmatpush1.xpose.msra.mxu0 0.0
        %1477 = vmatprep.subr.mxu0 0.0
        %1478 = vmatpush1.xpose.msra.mxu0 0.0
        %1479 = vmatprep.subr.mxu0 0.0
        %1480 = vmatpush1.xpose.msra.mxu0 0.0
        %1481 = vmatprep.subr.mxu0 0.0
        %1482 = vmatpush1.xpose.msra.mxu0 0.0
        %1483 = vmatprep.subr.mxu0 0.0
        %1484 = vmatpush1.xpose.msra.mxu0 0.0
        %1485 = vmatprep.subr.mxu0 0.0
        %1486 = vmatpush1.xpose.msra.mxu0 0.0
        %1487 = vmatprep.subr.mxu0 0.0
        %1488 = vmatpush1.xpose.msra.mxu0 0.0
        %1489 = vmatprep.subr.mxu0 0.0
        %1490 = vmatpush1.xpose.msra.mxu0 0.0
        %1491 = vmatprep.subr.mxu0 0.0
        %1492 = vmatpush1.xpose.msra.mxu0 0.0
        %1493 = vmatprep.subr.mxu0 0.0
        %1494 = vmatpush1.xpose.msra.mxu0 0.0
        %1495 = vmatprep.subr.mxu0 0.0
        %1496 = vmatpush1.xpose.msra.mxu0 0.0
        %1497 = vmatprep.subr.mxu0 0.0
        %1498 = vmatpush1.xpose.msra.mxu0 0.0
        %1499 = vmatprep.subr.mxu0 0.0
        %1500 = vmatpush1.xpose.msra.mxu0 0.0
        %1501 = vmatprep.subr.mxu0 0.0
        %1502 = vmatpush1.xpose.msra.mxu0 0.0
        %1503 = vmatprep.subr.mxu0 0.0
        %1504 = vmatpush1.xpose.msra.mxu0 0.0
        %1505 = vmatprep.subr.mxu0 0.0
        %1506 = vmatpush1.xpose.msra.mxu0 0.0
        %1507 = vmatprep.subr.mxu0 0.0
        %1508 = vmatpush1.xpose.msra.mxu0 0.0
        %1509 = vmatprep.subr.mxu0 0.0
        %1510 = vmatpush1.xpose.msra.mxu0 0.0
        %1511 = vmatprep.mubr.f32.mxu0 0.0
        %1512 = vmatmul.mubr.f32.gmra.mrb[0].mxu0 %v1372
        %v1513 = vpop.f32.mrb[0].mxu0
        %v1514 = vadd.f32 %v1444, %v1513
        %v1515 = vpop.f32.mrb[0].mxu0
        %1516 = vdwg.mxu0
        %v1517 = vld [vmem:[%s4] sm:$0xff]
        %v1518 = vld [vmem:[%s4 + $0x8] sm:$0x3]
        %v1519 = vld [vmem:[%s5] sm:$0x1]
        %vm1520 = vcmask 64512
        %v1522 = vsel %vm1520, %v1514, 0
        %v1525 = vsel %vm1520, %v1517, 0
        %v1528 = vsel %vm1520, %v1518, 0
        %1530 = vmatprep.subr.mxu0 0.0
        %1531 = vmatpush1.xpose.msra.mxu0 %v1525
        %1532 = vmatprep.subr.mxu0 0.0
        %1533 = vmatpush1.xpose.msra.mxu0 %v1528
        %1534 = vmatprep.subr.mxu0 0.0
        %1535 = vmatpush1.xpose.msra.mxu0 0.0
        %1536 = vmatprep.subr.mxu0 0.0
        %1537 = vmatpush1.xpose.msra.mxu0 0.0
        %1538 = vmatprep.subr.mxu0 0.0
        %1539 = vmatpush1.xpose.msra.mxu0 0.0
        %1540 = vmatprep.subr.mxu0 0.0
        %1541 = vmatpush1.xpose.msra.mxu0 0.0
        %1542 = vmatprep.subr.mxu0 0.0
        %1543 = vmatpush1.xpose.msra.mxu0 0.0
        %1544 = vmatprep.subr.mxu0 0.0
        %1545 = vmatpush1.xpose.msra.mxu0 0.0
        %1546 = vmatprep.subr.mxu0 0.0
        %1547 = vmatpush1.xpose.msra.mxu0 0.0
        %1548 = vmatprep.subr.mxu0 0.0
        %1549 = vmatpush1.xpose.msra.mxu0 0.0
        %1550 = vmatprep.subr.mxu0 0.0
        %1551 = vmatpush1.xpose.msra.mxu0 0.0
        %1552 = vmatprep.subr.mxu0 0.0
        %1553 = vmatpush1.xpose.msra.mxu0 0.0
        %1554 = vmatprep.subr.mxu0 0.0
        %1555 = vmatpush1.xpose.msra.mxu0 0.0
        %1556 = vmatprep.subr.mxu0 0.0
        %1557 = vmatpush1.xpose.msra.mxu0 0.0
        %1558 = vmatprep.subr.mxu0 0.0
        %1559 = vmatpush1.xpose.msra.mxu0 0.0
        %1560 = vmatprep.subr.mxu0 0.0
        %1561 = vmatpush1.xpose.msra.mxu0 0.0
        %1562 = vmatprep.subr.mxu0 0.0
        %1563 = vmatpush1.xpose.msra.mxu0 0.0
        %1564 = vmatprep.subr.mxu0 0.0
        %1565 = vmatpush1.xpose.msra.mxu0 0.0
        %1566 = vmatprep.subr.mxu0 0.0
        %1567 = vmatpush1.xpose.msra.mxu0 0.0
        %1568 = vmatprep.subr.mxu0 0.0
        %1569 = vmatpush1.xpose.msra.mxu0 0.0
        %1570 = vmatprep.subr.mxu0 0.0
        %1571 = vmatpush1.xpose.msra.mxu0 0.0
        %1572 = vmatprep.subr.mxu0 0.0
        %1573 = vmatpush1.xpose.msra.mxu0 0.0
        %1574 = vmatprep.subr.mxu0 0.0
        %1575 = vmatpush1.xpose.msra.mxu0 0.0
        %1576 = vmatprep.subr.mxu0 0.0
        %1577 = vmatpush1.xpose.msra.mxu0 0.0
        %1578 = vmatprep.subr.mxu0 0.0
        %1579 = vmatpush1.xpose.msra.mxu0 0.0
        %1580 = vmatprep.subr.mxu0 0.0
        %1581 = vmatpush1.xpose.msra.mxu0 0.0
        %1582 = vmatprep.subr.mxu0 0.0
        %1583 = vmatpush1.xpose.msra.mxu0 0.0
        %1584 = vmatprep.subr.mxu0 0.0
        %1585 = vmatpush1.xpose.msra.mxu0 0.0
        %1586 = vmatprep.subr.mxu0 0.0
        %1587 = vmatpush1.xpose.msra.mxu0 0.0
        %1588 = vmatprep.subr.mxu0 0.0
        %1589 = vmatpush1.xpose.msra.mxu0 0.0
        %1590 = vmatprep.subr.mxu0 0.0
        %1591 = vmatpush1.xpose.msra.mxu0 0.0
        %1592 = vmatprep.subr.mxu0 0.0
        %1593 = vmatpush1.xpose.msra.mxu0 0.0
        %1594 = vmatprep.mubr.f32.mxu0 0.0
        %1595 = vmatmul.mubr.f32.gmra.mrb[0].mxu0 %v1522
        %v1596 = vpop.f32.mrb[0].mxu0
        %v1597 = vadd.f32 %v1519, %v1596
        %v1598 = vpop.f32.mrb[0].mxu0
        %1599 = vdwg.mxu0
        %vm1600 = vcmask 73728
        %1601 = vst.msk [vmem:[%s243] sm:$0x1] %vm1600, %v1597
        %s1602 = sand.u32 %s159, 1
        %s1603 = scalar_lea.sflag [#allocation3], %s1602
        %s1604 = sand.u32 %s159, 1
        %s1605 = scalar_lea.vmem [#allocation2], %s1604
        // Predicated region
        $region45: #{inno_model_forward.1} parent=43 // pred_check
          %p1606 = pneg %p169
        $region46: #{inno_model_forward.1} parent=43 // pred_check_branch
          %1608 = sbr.rel (%p1606) target = $region48
        $region47: #{inno_model_forward.1} parent=43 // pred_region
          %s1610 = ssub.s32 16, 16
          %1611 = vsyncadd %s1603, %s1610
          %s1612 = smul.addr %s20, 16
          %s1613 = scalar_lea.hbm %s6, %s1612
          %s1615 = sshll.u32 %s1605, 4
          %s1616 = int_to_ptr.vmem [resolvable:$true] %s1615
          %1618 = dma.vmem_to_hbm [thread:$0]  %s1616, 16, %s1613, %s1603
        $region48: #{inno_model_forward.1} parent=43 // pred_fallthru
          _
      $region44: #{inno_model_forward.1} parent=5 // pred_fallthru
        _
      %p1619 = scmp.le.s32.totalorder 2, %s15
      // Predicated region
      $region49: #{inno_model_forward.1} parent=5 // pred_check
        %p1620 = pneg %p1619
      $region50: #{inno_model_forward.1} parent=5 // pred_check_branch
        %1622 = sbr.rel (%p1620) target = $region52
      $region51: #{inno_model_forward.1} parent=5 // pred_region
        %s1623 = ssub.s32 %s15, 2
        // Predicated region
        $region53: #{inno_model_forward.1} parent=51 // pred_check
          %p1624 = pneg %p175
        $region54: #{inno_model_forward.1} parent=51 // pred_check_branch
          %1626 = sbr.rel (%p1624) target = $region56
        $region55: #{inno_model_forward.1} parent=51 // pred_region
          %s1627 = sand.u32 %s160, 1
          %s1628 = scalar_lea.sflag [#allocation3], %s1627
          %s1629 = sand.u32 %s160, 1
          %s1630 = scalar_lea.vmem [#allocation2], %s1629
          %1631 = dma.done %s1628, 16
        $region56: #{inno_model_forward.1} parent=51 // pred_fallthru
          _
      $region52: #{inno_model_forward.1} parent=5 // pred_fallthru
        _
    $region6: #{inno_model_forward.1} parent=1 // loop_footer
      %s19 = sadd.s32 1, %s15
    $region7: #{inno_model_forward.1} parent=1 // loop_footer_branch
      %14 = sbr.rel target = $region3
    $region8: #{inno_model_forward.1} parent=1 // loop_exit
      _
    %1632 = vsyncpa [#allocation3], 1
    %s1633 = scalar_lea.sflag [#allocation3], 1
    %1634 = vsyncpa %s1633, 1

</llo_original>
